<compile_context>
chip_gen: v7x
topology: tpu7x:2x2x1
jax: 0.10.0
libtpu: 0.0.40
codegen_flags: <defaults>
</compile_context>

<pallas_src>
import math

import jax
import jax.numpy as jnp
from jax.experimental import pallas as pl
from jax.experimental.pallas import tpu as pltpu


def _round_up(n, m):
    return ((n + m - 1) // m) * m


# ------------------------------------------------------------------ kernel ---
def _kron_linear_kernel(x_ref, at_ref, bt_ref, bias_ref, o_ref):
    """Per row-tile: Y[n] = sum_s A_s @ X[n] @ B_s^T + bias (factor-only form).

    x_ref:    (TN, if1, if2)      input rows, natural (i1-major) layout
    at_ref:   (S, if1, of1)       A_s^T
    bt_ref:   (S, if2, of2)       B_s^T
    bias_ref: (of1, of2)          f32
    o_ref:    (TN, of1, of2)
    """
    tn, if1, if2 = x_ref.shape
    num_sum, _, of1 = at_ref.shape
    _, _, of2 = bt_ref.shape

    x = x_ref[...]                                   # compute dtype (f32/bf16)
    xf = x.reshape(tn * if1, if2)                    # merge leading dims only

    acc = jnp.zeros((tn * of2, of1), jnp.float32)
    for s in range(num_sum):                         # num_sum is tiny & static
        # stage 1: contract i2 against B_s^T  ->  u[n, i1, o2]
        u = jnp.dot(xf, bt_ref[s],
                    preferred_element_type=jnp.float32)          # (TN*if1, of2)
        # stage 2: contract i1 against A_s^T  ->  acc[n, o2, o1]
        ut = jnp.swapaxes(u.reshape(tn, if1, of2), 1, 2)         # (TN, of2, if1)
        uf = ut.reshape(tn * of2, if1).astype(x.dtype)           # compute dtype
        acc = acc + jnp.dot(uf, at_ref[s],
                            preferred_element_type=jnp.float32)  # (TN*of2, of1)

    out = jnp.swapaxes(acc.reshape(tn, of2, of1), 1, 2)          # (TN, of1, of2)
    o_ref[...] = (out + bias_ref[...]).astype(o_ref.dtype)


# ------------------------------------------------------------ tile sizing ----
def _auto_block_rows(if1, if2, of1, of2, itemsize,
                     budget_bytes=16 * 1024 * 1024):
    """Largest row tile (multiple of 32, capped at 1024) whose VMEM footprint —
    double-buffered x/out blocks plus f32 intermediates, with (8,128)
    lane/sublane padding on the small factor dims — fits the budget."""
    lane, sub = 128, 8
    x_row = _round_up(if1, sub) * _round_up(if2, lane) * itemsize
    o_row = _round_up(of1, sub) * _round_up(of2, lane) * itemsize
    tmp_row = 4 * (if1 * _round_up(of2, lane)             # stage-1 product
                   + of2 * _round_up(if1, lane)           # transposed copy
                   + of2 * _round_up(of1, lane)            # f32 accumulator
                   + _round_up(of1, sub) * _round_up(of2, lane))  # final tile
    per_row = 2 * (x_row + o_row) + tmp_row               # 2x: double buffering
    rows = budget_bytes // max(per_row, 1)
    return int(max(32, min(1024, (rows // 32) * 32)))


# ----------------------------------------------------------------- wrapper ---
def kronecker_linear(x, kn_factor_A, kn_factor_B, bias=None, *, block_n=None):
    """Forward pass of KroneckerLinear (efficient_sum semantics)."""
    num_sum, of1, if1 = kn_factor_A.shape
    num_sum_b, of2, if2 = kn_factor_B.shape
    assert num_sum_b == num_sum
    in_features = if1 * if2
    out_features = of1 * of2

    was_2d = x.ndim == 2
    if was_2d:
        x = x[:, None, :]
    bsz, seq, feat = x.shape
    assert feat == in_features
    n_rows = bsz * seq

    compute_dtype = x.dtype
    itemsize = jnp.dtype(compute_dtype).itemsize

    # Row tile: auto-sized from a VMEM budget (or user override), clamped to a
    # multiple of 32 so tiny inputs aren't over-padded and every dtype's native
    # sublane tile (f32:8, bf16:16, i8/fp8:32) is respected.
    if block_n is None:
        block_n = _auto_block_rows(if1, if2, of1, of2, itemsize)
    block_n_eff = max(32, _round_up(min(block_n, _round_up(n_rows, 32)), 32))
    n_pad = _round_up(n_rows, block_n_eff)

    x2 = x.reshape(n_rows, in_features)
    if n_pad != n_rows:
        x2 = jnp.pad(x2, ((0, n_pad - n_rows), (0, 0)))
    x3 = x2.reshape(n_pad, if1, if2)                    # row-major view (free)

    # Only the small factors are passed (transposed once, in the compute dtype).
    at = jnp.swapaxes(kn_factor_A, 1, 2).astype(compute_dtype)   # (S, if1, of1)
    bt = jnp.swapaxes(kn_factor_B, 1, 2).astype(compute_dtype)   # (S, if2, of2)
    if bias is None:
        bias2 = jnp.zeros((of1, of2), jnp.float32)
    else:
        bias2 = bias.reshape(of1, of2).astype(jnp.float32)

    grid = (n_pad // block_n_eff,)

    flops = 2 * n_pad * num_sum * (if1 * if2 * of2 + of2 * if1 * of1)
    bytes_accessed = (n_pad * (in_features + out_features) * itemsize
                      + (at.size + bt.size) * itemsize + bias2.size * 4)

    out = pl.pallas_call(
        _kron_linear_kernel,
        out_shape=jax.ShapeDtypeStruct((n_pad, of1, of2), compute_dtype),
        grid_spec=pltpu.PrefetchScalarGridSpec(
            num_scalar_prefetch=0,
            grid=grid,
            in_specs=[
                pl.BlockSpec((block_n_eff, if1, if2), lambda i: (i, 0, 0)),
                pl.BlockSpec((num_sum, if1, of1), lambda i: (0, 0, 0)),
                pl.BlockSpec((num_sum, if2, of2), lambda i: (0, 0, 0)),
                pl.BlockSpec((of1, of2), lambda i: (0, 0)),
            ],
            out_specs=pl.BlockSpec((block_n_eff, of1, of2),
                                   lambda i: (i, 0, 0)),
        ),
        compiler_params=pltpu.CompilerParams(
            dimension_semantics=("parallel",),
            vmem_limit_bytes=32 * 1024 * 1024),
        cost_estimate=pl.CostEstimate(flops=flops, transcendentals=0,
                                      bytes_accessed=bytes_accessed),
    )(x3, at, bt, bias2)

    out = out.reshape(n_pad, out_features)[:n_rows]     # HBM-layout-free reshape
    out = out.reshape(bsz, seq, out_features)
    if was_2d:
        out = out[:, 0, :]
    return out


# ------------------------------------------------------- params & reference --
def _get_optimal_factors(n):
    factor = int(math.sqrt(n))
    while factor > 1 and n % factor != 0:
        factor -= 1
    return (n // factor, factor)


def init_kronecker_params(key, in_features, out_features, num_sum=1):
    if1, if2 = _get_optimal_factors(in_features)
    of1, of2 = _get_optimal_factors(out_features)
    k_a, k_b, k_bias = jax.random.split(key, 3)
    # kaiming_uniform(a=sqrt(5)) bound == 1/sqrt(fan_in)
    bound_a = 1.0 / math.sqrt(of1 * if1)
    bound_b = 1.0 / math.sqrt(of2 * if2)
    bound_bias = 1.0 / math.sqrt(in_features)
    kn_a = jax.random.uniform(k_a, (num_sum, of1, if1), jnp.float32,
                              -bound_a, bound_a)
    kn_b = jax.random.uniform(k_b, (num_sum, of2, if2), jnp.float32,
                              -bound_b, bound_b)
    bias = jax.random.uniform(k_bias, (out_features,), jnp.float32,
                              -bound_bias, bound_bias)
    return kn_a, kn_b, bias


def reference_forward(x, kn_a, kn_b, bias):
    """Pure-JAX reference: explicit W = sum_s kron(A_s, B_s) (module's `weight`)."""
    num_sum = kn_a.shape[0]
    w = sum(jnp.kron(kn_a[s], kn_b[s]) for s in range(num_sum))
    y = jnp.einsum("...i,oi->...o", x, w, precision=jax.lax.Precision.HIGHEST)
    return y + bias


# TODO(synk): from_linear's SVD-based nearest-Kronecker init (torch.linalg.svd)
# is a host-side parameter-initialization utility, not part of the forward pass,
# so it is not implemented as a kernel.

# -------------------------------------------------------------------- main ---
if __name__ == "__main__":
    key = jax.random.PRNGKey(0)
    kp1, kx3, kx2, kp2, kx4 = jax.random.split(key, 5)

    # Case 1: square layer, num_sum=1 (module default), 3-D and 2-D inputs.
    in_f, out_f = 32, 32                       # factors -> (8, 4) x (8, 4)
    a1, b1, bias1 = init_kronecker_params(kp1, in_f, out_f, num_sum=1)

    x3 = jax.random.normal(kx3, (2, 8, in_f), jnp.float32)
    y3 = jax.block_until_ready(kronecker_linear(x3, a1, b1, bias1))
    r3 = reference_forward(x3, a1, b1, bias1)

    x2 = jax.random.normal(kx2, (4, in_f), jnp.float32)
    y2 = jax.block_until_ready(kronecker_linear(x2, a1, b1, bias1))
    r2 = reference_forward(x2, a1, b1, bias1)

    # Case 2: rectangular layer, num_sum=2 (exercises the Kronecker-sum loop),
    # row count (10) not a multiple of the tile -> exercises padding/slicing.
    in_f2, out_f2 = 48, 32                     # factors -> (8, 6) x (8, 4)
    a2, b2, bias2 = init_kronecker_params(kp2, in_f2, out_f2, num_sum=2)
    x4 = jax.random.normal(kx4, (2, 5, in_f2), jnp.float32)
    y4 = jax.block_until_ready(kronecker_linear(x4, a2, b2, bias2))
    r4 = reference_forward(x4, a2, b2, bias2)

    assert y3.shape == (2, 8, out_f) and y2.shape == (4, out_f)
    assert y4.shape == (2, 5, out_f2)
    assert jnp.allclose(y3, r3, rtol=1e-4, atol=1e-4), "3D mismatch"
    assert jnp.allclose(y2, r2, rtol=1e-4, atol=1e-4), "2D mismatch"
    assert jnp.allclose(y4, r4, rtol=1e-4, atol=1e-4), "num_sum=2 mismatch"
    print("KERNEL_OK")
</pallas_src>

<mosaic_0001>
module attributes {stable_mosaic.version = 11 : i64} {
  func.func @_kron_linear_kernel(%arg0: i32, %arg1: memref<32x8x4xf32, #tpu.memory_space<vmem>>, %arg2: memref<1x8x8xf32, #tpu.memory_space<vmem>>, %arg3: memref<1x4x4xf32, #tpu.memory_space<vmem>>, %arg4: memref<8x4xf32, #tpu.memory_space<vmem>>, %arg5: memref<32x8x4xf32, #tpu.memory_space<vmem>>) attributes {dimension_semantics = [#tpu.dimension_semantics<parallel>], iteration_bounds = array<i64: 1>, scalar_prefetch = 0 : i64, scratch_operands = 0 : i64, tpu.core_type = #tpu.core_type<tc>, window_params = [{transform_indices = @transform_0, window_bounds = array<i64: 32, 8, 4>}, {pipeline_mode = #tpu.pipeline_mode<synchronous>, transform_indices = @transform_1, window_bounds = array<i64: 1, 8, 8>}, {pipeline_mode = #tpu.pipeline_mode<synchronous>, transform_indices = @transform_2, window_bounds = array<i64: 1, 4, 4>}, {pipeline_mode = #tpu.pipeline_mode<synchronous>, transform_indices = @transform_3, window_bounds = array<i64: 8, 4>}, {transform_indices = @transform_4, window_bounds = array<i64: 32, 8, 4>}]} {
    %c0 = arith.constant 0 : index
    %c0_0 = arith.constant 0 : index
    %c0_1 = arith.constant 0 : index
    %0 = vector.load %arg1[%c0, %c0_0, %c0_1] : memref<32x8x4xf32, #tpu.memory_space<vmem>>, vector<32x8x4xf32>
    %1 = vector.shape_cast %0 : vector<32x8x4xf32> to vector<256x4xf32>
    %cst = arith.constant 0.000000e+00 : f32
    %2 = vector.broadcast %cst : f32 to vector<128x8xf32>
    %c0_2 = arith.constant 0 : index
    %c0_3 = arith.constant 0 : index
    %c0_4 = arith.constant 0 : index
    %3 = vector.load %arg3[%c0_2, %c0_3, %c0_4] : memref<1x4x4xf32, #tpu.memory_space<vmem>>, vector<1x4x4xf32>
    %4 = vector.shape_cast %3 : vector<1x4x4xf32> to vector<4x4xf32>
    %cst_5 = arith.constant dense<0.000000e+00> : vector<256x4xf32>
    %5 = tpu.matmul %1, %4, %cst_5 {dimension_numbers = #tpu.dot_dimension_numbers<[1], [0], [0], [1], [0, 0, 1, 1], [], []>} : vector<256x4xf32>, vector<4x4xf32>, vector<256x4xf32> -> vector<256x4xf32>
    %6 = vector.shape_cast %5 : vector<256x4xf32> to vector<32x8x4xf32>
    %7 = tpu.transpose %6, [0, 2, 1] : vector<32x8x4xf32> -> vector<32x4x8xf32>
    %8 = vector.shape_cast %7 : vector<32x4x8xf32> to vector<128x8xf32>
    %c0_6 = arith.constant 0 : index
    %c0_7 = arith.constant 0 : index
    %c0_8 = arith.constant 0 : index
    %9 = vector.load %arg2[%c0_6, %c0_7, %c0_8] : memref<1x8x8xf32, #tpu.memory_space<vmem>>, vector<1x8x8xf32>
    %10 = vector.shape_cast %9 : vector<1x8x8xf32> to vector<8x8xf32>
    %cst_9 = arith.constant dense<0.000000e+00> : vector<128x8xf32>
    %11 = tpu.matmul %8, %10, %cst_9 {dimension_numbers = #tpu.dot_dimension_numbers<[1], [0], [0], [1], [0, 0, 1, 1], [], []>} : vector<128x8xf32>, vector<8x8xf32>, vector<128x8xf32> -> vector<128x8xf32>
    %12 = arith.addf %2, %11 : vector<128x8xf32>
    %13 = vector.shape_cast %12 : vector<128x8xf32> to vector<32x4x8xf32>
    %14 = tpu.transpose %13, [0, 2, 1] : vector<32x4x8xf32> -> vector<32x8x4xf32>
    %c0_10 = arith.constant 0 : index
    %c0_11 = arith.constant 0 : index
    %15 = vector.load %arg4[%c0_10, %c0_11] : memref<8x4xf32, #tpu.memory_space<vmem>>, vector<8x4xf32>
    %16 = vector.shape_cast %15 : vector<8x4xf32> to vector<1x8x4xf32>
    %17 = vector.broadcast %16 : vector<1x8x4xf32> to vector<32x8x4xf32>
    %18 = arith.addf %14, %17 : vector<32x8x4xf32>
    %c0_12 = arith.constant 0 : index
    %c0_13 = arith.constant 0 : index
    %c0_14 = arith.constant 0 : index
    %19 = vector.load %arg5[%c0_12, %c0_13, %c0_14] : memref<32x8x4xf32, #tpu.memory_space<vmem>>, vector<32x8x4xf32>
    tpu.vector_store %arg5[%c0_12, %c0_13, %c0_14], %18 {strides = array<i32>} : memref<32x8x4xf32, #tpu.memory_space<vmem>>, vector<32x8x4xf32>,
    return
  }
  func.func @transform_0(%arg0: i32) -> (i32, i32, i32) {
    %c0_i32 = arith.constant 0 : i32
    %c0_i32_0 = arith.constant 0 : i32
    %c0_i32_1 = arith.constant 0 : i32
    return %arg0, %c0_i32, %c0_i32_0 : i32, i32, i32
  }
  func.func @transform_1(%arg0: i32) -> (i32, i32, i32) {
    %c0_i32 = arith.constant 0 : i32
    %c0_i32_0 = arith.constant 0 : i32
    %c0_i32_1 = arith.constant 0 : i32
    %c0_i32_2 = arith.constant 0 : i32
    return %c0_i32, %c0_i32_0, %c0_i32_1 : i32, i32, i32
  }
  func.func @transform_2(%arg0: i32) -> (i32, i32, i32) {
    %c0_i32 = arith.constant 0 : i32
    %c0_i32_0 = arith.constant 0 : i32
    %c0_i32_1 = arith.constant 0 : i32
    %c0_i32_2 = arith.constant 0 : i32
    return %c0_i32, %c0_i32_0, %c0_i32_1 : i32, i32, i32
  }
  func.func @transform_3(%arg0: i32) -> (i32, i32) {
    %c0_i32 = arith.constant 0 : i32
    %c0_i32_0 = arith.constant 0 : i32
    %c0_i32_1 = arith.constant 0 : i32
    return %c0_i32, %c0_i32_0 : i32, i32
  }
  func.func @transform_4(%arg0: i32) -> (i32, i32, i32) {
    %c0_i32 = arith.constant 0 : i32
    %c0_i32_0 = arith.constant 0 : i32
    %c0_i32_1 = arith.constant 0 : i32
    return %arg0, %c0_i32, %c0_i32_0 : i32, i32, i32
  }
}

</mosaic_0001>

<llo_original>
// kernel: tpu_custom_call.1
$region0: #{tpu_custom_call.1}
  #allocation0 [shape = 'u32[]', space=smem, size = 0x4, offset = 0x4, fixed_abs, tag = 'smem constant byte address 0x4 - core index']
  #allocation1 [shape = 'u32[144,128]{1,0:T(1,128)}', space=vmem, size = 0x12000, scoped, tag = 'internal scratch']
  %s0 = inlined_call_operand.vmem [shape: f32[32,8,4], index: 0, kind: input, shape index: {}]
  %s1 = inlined_call_operand.vmem [shape: f32[1,8,8], index: 1, kind: input, shape index: {}]
  %s2 = inlined_call_operand.vmem [shape: f32[1,4,4], index: 2, kind: input, shape index: {}]
  %s3 = inlined_call_operand.vmem [shape: f32[8,4], index: 3, kind: input, shape index: {}]
  %s4 = inlined_call_operand.vmem [shape: f32[32,8,4], index: 4, kind: output, shape index: {}]
  %s5 = sld [smem:[#allocation0]]
  $region26: #{tpu_custom_call.1} parent=0
    _
  %s7 = ssub.s32 1, %s5
  %s8 = scalar_select 0, %s7, %s5
  // Predicated region
  $region2: #{tpu_custom_call.1} parent=0 // pred_check
    _
  $region3: #{tpu_custom_call.1} parent=0 // pred_check_branch
    %10 = sbr.rel (0) target = $region5
  $region4: #{tpu_custom_call.1} parent=0 // pred_region
    _
  $region5: #{tpu_custom_call.1} parent=0 // pred_fallthru
    _
  // Predicated region
  $region6: #{tpu_custom_call.1} parent=0 // pred_check
    _
  $region7: #{tpu_custom_call.1} parent=0 // pred_check_branch
    %12 = sbr.rel (0) target = $region9
  $region8: #{tpu_custom_call.1} parent=0 // pred_region
    _
  $region9: #{tpu_custom_call.1} parent=0 // pred_fallthru
    _
  // Predicated region
  $region10: #{tpu_custom_call.1} parent=0 // pred_check
    _
  $region11: #{tpu_custom_call.1} parent=0 // pred_check_branch
    %14 = sbr.rel (0) target = $region13
  $region12: #{tpu_custom_call.1} parent=0 // pred_region
    _
  $region13: #{tpu_custom_call.1} parent=0 // pred_fallthru
    _
  // Predicated region
  $region14: #{tpu_custom_call.1} parent=0 // pred_check
    _
  $region15: #{tpu_custom_call.1} parent=0 // pred_check_branch
    %16 = sbr.rel (0) target = $region17
  $region16: #{tpu_custom_call.1} parent=0 // pred_region
    _
  $region17: #{tpu_custom_call.1} parent=0 // pred_fallthru
    _
  %v17 = vld [vmem:[%s0] sm:$0xff]
  %v18 = vld [vmem:[%s0 + $0x8] sm:$0xff]
  %v19 = vld [vmem:[%s0 + $0x10] sm:$0xff]
  %v20 = vld [vmem:[%s0 + $0x18] sm:$0xff]
  %v21 = vld [vmem:[%s0 + $0x20] sm:$0xff]
  %v22 = vld [vmem:[%s0 + $0x28] sm:$0xff]
  %v23 = vld [vmem:[%s0 + $0x30] sm:$0xff]
  %v24 = vld [vmem:[%s0 + $0x38] sm:$0xff]
  %v25 = vld [vmem:[%s0 + $0x40] sm:$0xff]
  %v26 = vld [vmem:[%s0 + $0x48] sm:$0xff]
  %v27 = vld [vmem:[%s0 + $0x50] sm:$0xff]
  %v28 = vld [vmem:[%s0 + $0x58] sm:$0xff]
  %v29 = vld [vmem:[%s0 + $0x60] sm:$0xff]
  %v30 = vld [vmem:[%s0 + $0x68] sm:$0xff]
  %v31 = vld [vmem:[%s0 + $0x70] sm:$0xff]
  %v32 = vld [vmem:[%s0 + $0x78] sm:$0xff]
  %v33 = vld [vmem:[%s0 + $0x80] sm:$0xff]
  %v34 = vld [vmem:[%s0 + $0x88] sm:$0xff]
  %v35 = vld [vmem:[%s0 + $0x90] sm:$0xff]
  %v36 = vld [vmem:[%s0 + $0x98] sm:$0xff]
  %v37 = vld [vmem:[%s0 + $0xa0] sm:$0xff]
  %v38 = vld [vmem:[%s0 + $0xa8] sm:$0xff]
  %v39 = vld [vmem:[%s0 + $0xb0] sm:$0xff]
  %v40 = vld [vmem:[%s0 + $0xb8] sm:$0xff]
  %v41 = vld [vmem:[%s0 + $0xc0] sm:$0xff]
  %v42 = vld [vmem:[%s0 + $0xc8] sm:$0xff]
  %v43 = vld [vmem:[%s0 + $0xd0] sm:$0xff]
  %v44 = vld [vmem:[%s0 + $0xd8] sm:$0xff]
  %v45 = vld [vmem:[%s0 + $0xe0] sm:$0xff]
  %v46 = vld [vmem:[%s0 + $0xe8] sm:$0xff]
  %v47 = vld [vmem:[%s0 + $0xf0] sm:$0xff]
  %v48 = vld [vmem:[%s0 + $0xf8] sm:$0xff]
  %v49 = vld [vmem:[%s2] sm:$0xf]
  %vm50 = vcmask 31744
  %v52 = vsel %vm50, %v17, 0
  %v55 = vsel %vm50, %v18, 0
  %v58 = vsel %vm50, %v19, 0
  %v61 = vsel %vm50, %v20, 0
  %v64 = vsel %vm50, %v21, 0
  %v67 = vsel %vm50, %v22, 0
  %v70 = vsel %vm50, %v23, 0
  %v73 = vsel %vm50, %v24, 0
  %v76 = vsel %vm50, %v25, 0
  %v79 = vsel %vm50, %v26, 0
  %v82 = vsel %vm50, %v27, 0
  %v85 = vsel %vm50, %v28, 0
  %v88 = vsel %vm50, %v29, 0
  %v91 = vsel %vm50, %v30, 0
  %v94 = vsel %vm50, %v31, 0
  %v97 = vsel %vm50, %v32, 0
  %v100 = vsel %vm50, %v33, 0
  %v103 = vsel %vm50, %v34, 0
  %v106 = vsel %vm50, %v35, 0
  %v109 = vsel %vm50, %v36, 0
  %v112 = vsel %vm50, %v37, 0
  %v115 = vsel %vm50, %v38, 0
  %v118 = vsel %vm50, %v39, 0
  %v121 = vsel %vm50, %v40, 0
  %v124 = vsel %vm50, %v41, 0
  %v127 = vsel %vm50, %v42, 0
  %v130 = vsel %vm50, %v43, 0
  %v133 = vsel %vm50, %v44, 0
  %v136 = vsel %vm50, %v45, 0
  %v139 = vsel %vm50, %v46, 0
  %v142 = vsel %vm50, %v47, 0
  %v145 = vsel %vm50, %v48, 0
  %vm147 = vcmask 1043456
  %v149 = vsel %vm147, %v49, 0
  %151 = vmatprep.subr.mxu0 0.0
  %152 = vmatpush1.msra.mxu0 %v149
  %153 = vmatprep.subr.mxu0 0.0
  %154 = vmatpush1.msra.mxu0 0.0
  %155 = vmatprep.subr.mxu0 0.0
  %156 = vmatpush1.msra.mxu0 0.0
  %157 = vmatprep.subr.mxu0 0.0
  %158 = vmatpush1.msra.mxu0 0.0
  %159 = vmatprep.subr.mxu0 0.0
  %160 = vmatpush1.msra.mxu0 0.0
  %161 = vmatprep.subr.mxu0 0.0
  %162 = vmatpush1.msra.mxu0 0.0
  %163 = vmatprep.subr.mxu0 0.0
  %164 = vmatpush1.msra.mxu0 0.0
  %165 = vmatprep.subr.mxu0 0.0
  %166 = vmatpush1.msra.mxu0 0.0
  %167 = vmatprep.subr.mxu0 0.0
  %168 = vmatpush1.msra.mxu0 0.0
  %169 = vmatprep.subr.mxu0 0.0
  %170 = vmatpush1.msra.mxu0 0.0
  %171 = vmatprep.subr.mxu0 0.0
  %172 = vmatpush1.msra.mxu0 0.0
  %173 = vmatprep.subr.mxu0 0.0
  %174 = vmatpush1.msra.mxu0 0.0
  %175 = vmatprep.subr.mxu0 0.0
  %176 = vmatpush1.msra.mxu0 0.0
  %177 = vmatprep.subr.mxu0 0.0
  %178 = vmatpush1.msra.mxu0 0.0
  %179 = vmatprep.subr.mxu0 0.0
  %180 = vmatpush1.msra.mxu0 0.0
  %181 = vmatprep.subr.mxu0 0.0
  %182 = vmatpush1.msra.mxu0 0.0
  %183 = vmatprep.subr.mxu0 0.0
  %184 = vmatpush1.msra.mxu0 0.0
  %185 = vmatprep.subr.mxu0 0.0
  %186 = vmatpush1.msra.mxu0 0.0
  %187 = vmatprep.subr.mxu0 0.0
  %188 = vmatpush1.msra.mxu0 0.0
  %189 = vmatprep.subr.mxu0 0.0
  %190 = vmatpush1.msra.mxu0 0.0
  %191 = vmatprep.subr.mxu0 0.0
  %192 = vmatpush1.msra.mxu0 0.0
  %193 = vmatprep.subr.mxu0 0.0
  %194 = vmatpush1.msra.mxu0 0.0
  %195 = vmatprep.subr.mxu0 0.0
  %196 = vmatpush1.msra.mxu0 0.0
  %197 = vmatprep.subr.mxu0 0.0
  %198 = vmatpush1.msra.mxu0 0.0
  %199 = vmatprep.subr.mxu0 0.0
  %200 = vmatpush1.msra.mxu0 0.0
  %201 = vmatprep.subr.mxu0 0.0
  %202 = vmatpush1.msra.mxu0 0.0
  %203 = vmatprep.subr.mxu0 0.0
  %204 = vmatpush1.msra.mxu0 0.0
  %205 = vmatprep.subr.mxu0 0.0
  %206 = vmatpush1.msra.mxu0 0.0
  %207 = vmatprep.subr.mxu0 0.0
  %208 = vmatpush1.msra.mxu0 0.0
  %209 = vmatprep.subr.mxu0 0.0
  %210 = vmatpush1.msra.mxu0 0.0
  %211 = vmatprep.subr.mxu0 0.0
  %212 = vmatpush1.msra.mxu0 0.0
  %213 = vmatprep.subr.mxu0 0.0
  %214 = vmatpush1.msra.mxu0 0.0
  %215 = vmatprep.mubr.f32.mxu0 0.0
  %216 = vmatmul.mubr.f32.gmra.mrb[0].mxu0 %v52
  %v217 = vpop.f32.mrb[0].mxu0
  %v218 = vadd.f32 0.0, %v217
  %v219 = vpop.f32.mrb[0].mxu0
  %220 = vmatprep.mubr.f32.mxu0 0.0
  %221 = vmatmul.mubr.f32.gmra.mrb[0].mxu0 %v55
  %v222 = vpop.f32.mrb[0].mxu0
  %v223 = vadd.f32 0.0, %v222
  %v224 = vpop.f32.mrb[0].mxu0
  %225 = vmatprep.mubr.f32.mxu0 0.0
  %226 = vmatmul.mubr.f32.gmra.mrb[0].mxu0 %v58
  %v227 = vpop.f32.mrb[0].mxu0
  %v228 = vadd.f32 0.0, %v227
  %v229 = vpop.f32.mrb[0].mxu0
  %230 = vmatprep.mubr.f32.mxu0 0.0
  %231 = vmatmul.mubr.f32.gmra.mrb[0].mxu0 %v61
  %v232 = vpop.f32.mrb[0].mxu0
  %v233 = vadd.f32 0.0, %v232
  %v234 = vpop.f32.mrb[0].mxu0
  %235 = vmatprep.mubr.f32.mxu0 0.0
  %236 = vmatmul.mubr.f32.gmra.mrb[0].mxu0 %v64
  %v237 = vpop.f32.mrb[0].mxu0
  %v238 = vadd.f32 0.0, %v237
  %v239 = vpop.f32.mrb[0].mxu0
  %240 = vmatprep.mubr.f32.mxu0 0.0
  %241 = vmatmul.mubr.f32.gmra.mrb[0].mxu0 %v67
  %v242 = vpop.f32.mrb[0].mxu0
  %v243 = vadd.f32 0.0, %v242
  %v244 = vpop.f32.mrb[0].mxu0
  %245 = vmatprep.mubr.f32.mxu0 0.0
  %246 = vmatmul.mubr.f32.gmra.mrb[0].mxu0 %v70
  %v247 = vpop.f32.mrb[0].mxu0
  %v248 = vadd.f32 0.0, %v247
  %v249 = vpop.f32.mrb[0].mxu0
  %250 = vmatprep.mubr.f32.mxu0 0.0
  %251 = vmatmul.mubr.f32.gmra.mrb[0].mxu0 %v73
  %v252 = vpop.f32.mrb[0].mxu0
  %v253 = vadd.f32 0.0, %v252
  %v254 = vpop.f32.mrb[0].mxu0
  %255 = vmatprep.mubr.f32.mxu0 0.0
  %256 = vmatmul.mubr.f32.gmra.mrb[0].mxu0 %v76
  %v257 = vpop.f32.mrb[0].mxu0
  %v258 = vadd.f32 0.0, %v257
  %v259 = vpop.f32.mrb[0].mxu0
  %260 = vmatprep.mubr.f32.mxu0 0.0
  %261 = vmatmul.mubr.f32.gmra.mrb[0].mxu0 %v79
  %v262 = vpop.f32.mrb[0].mxu0
  %v263 = vadd.f32 0.0, %v262
  %v264 = vpop.f32.mrb[0].mxu0
  %265 = vmatprep.mubr.f32.mxu0 0.0
  %266 = vmatmul.mubr.f32.gmra.mrb[0].mxu0 %v82
  %v267 = vpop.f32.mrb[0].mxu0
  %v268 = vadd.f32 0.0, %v267
  %v269 = vpop.f32.mrb[0].mxu0
  %270 = vmatprep.mubr.f32.mxu0 0.0
  %271 = vmatmul.mubr.f32.gmra.mrb[0].mxu0 %v85
  %v272 = vpop.f32.mrb[0].mxu0
  %v273 = vadd.f32 0.0, %v272
  %v274 = vpop.f32.mrb[0].mxu0
  %275 = vmatprep.mubr.f32.mxu0 0.0
  %276 = vmatmul.mubr.f32.gmra.mrb[0].mxu0 %v88
  %v277 = vpop.f32.mrb[0].mxu0
  %v278 = vadd.f32 0.0, %v277
  %v279 = vpop.f32.mrb[0].mxu0
  %280 = vmatprep.mubr.f32.mxu0 0.0
  %281 = vmatmul.mubr.f32.gmra.mrb[0].mxu0 %v91
  %v282 = vpop.f32.mrb[0].mxu0
  %v283 = vadd.f32 0.0, %v282
  %v284 = vpop.f32.mrb[0].mxu0
  %285 = vmatprep.mubr.f32.mxu0 0.0
  %286 = vmatmul.mubr.f32.gmra.mrb[0].mxu0 %v94
  %v287 = vpop.f32.mrb[0].mxu0
  %v288 = vadd.f32 0.0, %v287
  %v289 = vpop.f32.mrb[0].mxu0
  %290 = vmatprep.mubr.f32.mxu0 0.0
  %291 = vmatmul.mubr.f32.gmra.mrb[0].mxu0 %v97
  %v292 = vpop.f32.mrb[0].mxu0
  %v293 = vadd.f32 0.0, %v292
  %v294 = vpop.f32.mrb[0].mxu0
  %295 = vmatprep.mubr.f32.mxu0 0.0
  %296 = vmatmul.mubr.f32.gmra.mrb[0].mxu0 %v100
  %v297 = vpop.f32.mrb[0].mxu0
  %v298 = vadd.f32 0.0, %v297
  %v299 = vpop.f32.mrb[0].mxu0
  %300 = vmatprep.mubr.f32.mxu0 0.0
  %301 = vmatmul.mubr.f32.gmra.mrb[0].mxu0 %v103
  %v302 = vpop.f32.mrb[0].mxu0
  %v303 = vadd.f32 0.0, %v302
  %v304 = vpop.f32.mrb[0].mxu0
  %305 = vmatprep.mubr.f32.mxu0 0.0
  %306 = vmatmul.mubr.f32.gmra.mrb[0].mxu0 %v106
  %v307 = vpop.f32.mrb[0].mxu0
  %v308 = vadd.f32 0.0, %v307
  %v309 = vpop.f32.mrb[0].mxu0
  %310 = vmatprep.mubr.f32.mxu0 0.0
  %311 = vmatmul.mubr.f32.gmra.mrb[0].mxu0 %v109
  %v312 = vpop.f32.mrb[0].mxu0
  %v313 = vadd.f32 0.0, %v312
  %v314 = vpop.f32.mrb[0].mxu0
  %315 = vmatprep.mubr.f32.mxu0 0.0
  %316 = vmatmul.mubr.f32.gmra.mrb[0].mxu0 %v112
  %v317 = vpop.f32.mrb[0].mxu0
  %v318 = vadd.f32 0.0, %v317
  %v319 = vpop.f32.mrb[0].mxu0
  %320 = vmatprep.mubr.f32.mxu0 0.0
  %321 = vmatmul.mubr.f32.gmra.mrb[0].mxu0 %v115
  %v322 = vpop.f32.mrb[0].mxu0
  %v323 = vadd.f32 0.0, %v322
  %v324 = vpop.f32.mrb[0].mxu0
  %325 = vmatprep.mubr.f32.mxu0 0.0
  %326 = vmatmul.mubr.f32.gmra.mrb[0].mxu0 %v118
  %v327 = vpop.f32.mrb[0].mxu0
  %v328 = vadd.f32 0.0, %v327
  %v329 = vpop.f32.mrb[0].mxu0
  %330 = vmatprep.mubr.f32.mxu0 0.0
  %331 = vmatmul.mubr.f32.gmra.mrb[0].mxu0 %v121
  %v332 = vpop.f32.mrb[0].mxu0
  %v333 = vadd.f32 0.0, %v332
  %v334 = vpop.f32.mrb[0].mxu0
  %335 = vmatprep.mubr.f32.mxu0 0.0
  %336 = vmatmul.mubr.f32.gmra.mrb[0].mxu0 %v124
  %v337 = vpop.f32.mrb[0].mxu0
  %v338 = vadd.f32 0.0, %v337
  %v339 = vpop.f32.mrb[0].mxu0
  %340 = vmatprep.mubr.f32.mxu0 0.0
  %341 = vmatmul.mubr.f32.gmra.mrb[0].mxu0 %v127
  %v342 = vpop.f32.mrb[0].mxu0
  %v343 = vadd.f32 0.0, %v342
  %v344 = vpop.f32.mrb[0].mxu0
  %345 = vmatprep.mubr.f32.mxu0 0.0
  %346 = vmatmul.mubr.f32.gmra.mrb[0].mxu0 %v130
  %v347 = vpop.f32.mrb[0].mxu0
  %v348 = vadd.f32 0.0, %v347
  %v349 = vpop.f32.mrb[0].mxu0
  %350 = vmatprep.mubr.f32.mxu0 0.0
  %351 = vmatmul.mubr.f32.gmra.mrb[0].mxu0 %v133
  %v352 = vpop.f32.mrb[0].mxu0
  %v353 = vadd.f32 0.0, %v352
  %v354 = vpop.f32.mrb[0].mxu0
  %355 = vmatprep.mubr.f32.mxu0 0.0
  %356 = vmatmul.mubr.f32.gmra.mrb[0].mxu0 %v136
  %v357 = vpop.f32.mrb[0].mxu0
  %v358 = vadd.f32 0.0, %v357
  %v359 = vpop.f32.mrb[0].mxu0
  %360 = vmatprep.mubr.f32.mxu0 0.0
  %361 = vmatmul.mubr.f32.gmra.mrb[0].mxu0 %v139
  %v362 = vpop.f32.mrb[0].mxu0
  %v363 = vadd.f32 0.0, %v362
  %v364 = vpop.f32.mrb[0].mxu0
  %365 = vmatprep.mubr.f32.mxu0 0.0
  %366 = vmatmul.mubr.f32.gmra.mrb[0].mxu0 %v142
  %v367 = vpop.f32.mrb[0].mxu0
  %v368 = vadd.f32 0.0, %v367
  %v369 = vpop.f32.mrb[0].mxu0
  %370 = vmatprep.mubr.f32.mxu0 0.0
  %371 = vmatmul.mubr.f32.gmra.mrb[0].mxu0 %v145
  %v372 = vpop.f32.mrb[0].mxu0
  %v373 = vadd.f32 0.0, %v372
  %v374 = vpop.f32.mrb[0].mxu0
  %375 = vdwg.mxu0
  %376 = vxpose.xlu0.b32.start [1/16] %v218, 128
  %377 = vxpose.xlu0.b32.cont [2/16] 0.0, 128
  %378 = vxpose.xlu0.b32.cont [3/16] 0.0, 128
  %379 = vxpose.xlu0.b32.cont [4/16] 0.0, 128
  %380 = vxpose.xlu0.b32.cont [5/16] 0.0, 128
  %381 = vxpose.xlu0.b32.cont [6/16] 0.0, 128
  %382 = vxpose.xlu0.b32.cont [7/16] 0.0, 128
  %383 = vxpose.xlu0.b32.cont [8/16] 0.0, 128
  %384 = vxpose.xlu0.b32.cont [9/16] 0.0, 128
  %385 = vxpose.xlu0.b32.cont [10/16] 0.0, 128
  %386 = vxpose.xlu0.b32.cont [11/16] 0.0, 128
  %387 = vxpose.xlu0.b32.cont [12/16] 0.0, 128
  %388 = vxpose.xlu0.b32.cont [13/16] 0.0, 128
  %389 = vxpose.xlu0.b32.cont [14/16] 0.0, 128
  %390 = vxpose.xlu0.b32.cont [15/16] 0.0, 128
  %391 = vxpose.xlu0.b32.end [16/16] 0.0, 128
  %v392 = vpop.trf.xlu0
  %v393 = vpop.trf.xlu0
  %v394 = vpop.trf.xlu0
  %v395 = vpop.trf.xlu0
  %v396 = vpop.trf.xlu0
  %v397 = vpop.trf.xlu0
  %v398 = vpop.trf.xlu0
  %v399 = vpop.trf.xlu0
  %v400 = vpop.trf.xlu0
  %v401 = vpop.trf.xlu0
  %v402 = vpop.trf.xlu0
  %v403 = vpop.trf.xlu0
  %v404 = vpop.trf.xlu0
  %v405 = vpop.trf.xlu0
  %v406 = vpop.trf.xlu0
  %v407 = vpop.trf.xlu0
  %408 = vxpose.xlu0.b32.start [1/16] %v223, 128
  %409 = vxpose.xlu0.b32.cont [2/16] 0.0, 128
  %410 = vxpose.xlu0.b32.cont [3/16] 0.0, 128
  %411 = vxpose.xlu0.b32.cont [4/16] 0.0, 128
  %412 = vxpose.xlu0.b32.cont [5/16] 0.0, 128
  %413 = vxpose.xlu0.b32.cont [6/16] 0.0, 128
  %414 = vxpose.xlu0.b32.cont [7/16] 0.0, 128
  %415 = vxpose.xlu0.b32.cont [8/16] 0.0, 128
  %416 = vxpose.xlu0.b32.cont [9/16] 0.0, 128
  %417 = vxpose.xlu0.b32.cont [10/16] 0.0, 128
  %418 = vxpose.xlu0.b32.cont [11/16] 0.0, 128
  %419 = vxpose.xlu0.b32.cont [12/16] 0.0, 128
  %420 = vxpose.xlu0.b32.cont [13/16] 0.0, 128
  %421 = vxpose.xlu0.b32.cont [14/16] 0.0, 128
  %422 = vxpose.xlu0.b32.cont [15/16] 0.0, 128
  %423 = vxpose.xlu0.b32.end [16/16] 0.0, 128
  %v424 = vpop.trf.xlu0
  %v425 = vpop.trf.xlu0
  %v426 = vpop.trf.xlu0
  %v427 = vpop.trf.xlu0
  %v428 = vpop.trf.xlu0
  %v429 = vpop.trf.xlu0
  %v430 = vpop.trf.xlu0
  %v431 = vpop.trf.xlu0
  %v432 = vpop.trf.xlu0
  %v433 = vpop.trf.xlu0
  %v434 = vpop.trf.xlu0
  %v435 = vpop.trf.xlu0
  %v436 = vpop.trf.xlu0
  %v437 = vpop.trf.xlu0
  %v438 = vpop.trf.xlu0
  %v439 = vpop.trf.xlu0
  %440 = vxpose.xlu0.b32.start [1/16] %v228, 128
  %441 = vxpose.xlu0.b32.cont [2/16] 0.0, 128
  %442 = vxpose.xlu0.b32.cont [3/16] 0.0, 128
  %443 = vxpose.xlu0.b32.cont [4/16] 0.0, 128
  %444 = vxpose.xlu0.b32.cont [5/16] 0.0, 128
  %445 = vxpose.xlu0.b32.cont [6/16] 0.0, 128
  %446 = vxpose.xlu0.b32.cont [7/16] 0.0, 128
  %447 = vxpose.xlu0.b32.cont [8/16] 0.0, 128
  %448 = vxpose.xlu0.b32.cont [9/16] 0.0, 128
  %449 = vxpose.xlu0.b32.cont [10/16] 0.0, 128
  %450 = vxpose.xlu0.b32.cont [11/16] 0.0, 128
  %451 = vxpose.xlu0.b32.cont [12/16] 0.0, 128
  %452 = vxpose.xlu0.b32.cont [13/16] 0.0, 128
  %453 = vxpose.xlu0.b32.cont [14/16] 0.0, 128
  %454 = vxpose.xlu0.b32.cont [15/16] 0.0, 128
  %455 = vxpose.xlu0.b32.end [16/16] 0.0, 128
  %v456 = vpop.trf.xlu0
  %v457 = vpop.trf.xlu0
  %v458 = vpop.trf.xlu0
  %v459 = vpop.trf.xlu0
  %v460 = vpop.trf.xlu0
  %v461 = vpop.trf.xlu0
  %v462 = vpop.trf.xlu0
  %v463 = vpop.trf.xlu0
  %v464 = vpop.trf.xlu0
  %v465 = vpop.trf.xlu0
  %v466 = vpop.trf.xlu0
  %v467 = vpop.trf.xlu0
  %v468 = vpop.trf.xlu0
  %v469 = vpop.trf.xlu0
  %v470 = vpop.trf.xlu0
  %v471 = vpop.trf.xlu0
  %472 = vxpose.xlu0.b32.start [1/16] %v233, 128
  %473 = vxpose.xlu0.b32.cont [2/16] 0.0, 128
  %474 = vxpose.xlu0.b32.cont [3/16] 0.0, 128
  %475 = vxpose.xlu0.b32.cont [4/16] 0.0, 128
  %476 = vxpose.xlu0.b32.cont [5/16] 0.0, 128
  %477 = vxpose.xlu0.b32.cont [6/16] 0.0, 128
  %478 = vxpose.xlu0.b32.cont [7/16] 0.0, 128
  %479 = vxpose.xlu0.b32.cont [8/16] 0.0, 128
  %480 = vxpose.xlu0.b32.cont [9/16] 0.0, 128
  %481 = vxpose.xlu0.b32.cont [10/16] 0.0, 128
  %482 = vxpose.xlu0.b32.cont [11/16] 0.0, 128
  %483 = vxpose.xlu0.b32.cont [12/16] 0.0, 128
  %484 = vxpose.xlu0.b32.cont [13/16] 0.0, 128
  %485 = vxpose.xlu0.b32.cont [14/16] 0.0, 128
  %486 = vxpose.xlu0.b32.cont [15/16] 0.0, 128
  %487 = vxpose.xlu0.b32.end [16/16] 0.0, 128
  %v488 = vpop.trf.xlu0
  %v489 = vpop.trf.xlu0
  %v490 = vpop.trf.xlu0
  %v491 = vpop.trf.xlu0
  %v492 = vpop.trf.xlu0
  %v493 = vpop.trf.xlu0
  %v494 = vpop.trf.xlu0
  %v495 = vpop.trf.xlu0
  %v496 = vpop.trf.xlu0
  %v497 = vpop.trf.xlu0
  %v498 = vpop.trf.xlu0
  %v499 = vpop.trf.xlu0
  %v500 = vpop.trf.xlu0
  %v501 = vpop.trf.xlu0
  %v502 = vpop.trf.xlu0
  %v503 = vpop.trf.xlu0
  %504 = vxpose.xlu0.b32.start [1/16] %v238, 128
  %505 = vxpose.xlu0.b32.cont [2/16] 0.0, 128
  %506 = vxpose.xlu0.b32.cont [3/16] 0.0, 128
  %507 = vxpose.xlu0.b32.cont [4/16] 0.0, 128
  %508 = vxpose.xlu0.b32.cont [5/16] 0.0, 128
  %509 = vxpose.xlu0.b32.cont [6/16] 0.0, 128
  %510 = vxpose.xlu0.b32.cont [7/16] 0.0, 128
  %511 = vxpose.xlu0.b32.cont [8/16] 0.0, 128
  %512 = vxpose.xlu0.b32.cont [9/16] 0.0, 128
  %513 = vxpose.xlu0.b32.cont [10/16] 0.0, 128
  %514 = vxpose.xlu0.b32.cont [11/16] 0.0, 128
  %515 = vxpose.xlu0.b32.cont [12/16] 0.0, 128
  %516 = vxpose.xlu0.b32.cont [13/16] 0.0, 128
  %517 = vxpose.xlu0.b32.cont [14/16] 0.0, 128
  %518 = vxpose.xlu0.b32.cont [15/16] 0.0, 128
  %519 = vxpose.xlu0.b32.end [16/16] 0.0, 128
  %v520 = vpop.trf.xlu0
  %v521 = vpop.trf.xlu0
  %v522 = vpop.trf.xlu0
  %v523 = vpop.trf.xlu0
  %v524 = vpop.trf.xlu0
  %v525 = vpop.trf.xlu0
  %v526 = vpop.trf.xlu0
  %v527 = vpop.trf.xlu0
  %v528 = vpop.trf.xlu0
  %v529 = vpop.trf.xlu0
  %v530 = vpop.trf.xlu0
  %v531 = vpop.trf.xlu0
  %v532 = vpop.trf.xlu0
  %v533 = vpop.trf.xlu0
  %v534 = vpop.trf.xlu0
  %v535 = vpop.trf.xlu0
  %536 = vxpose.xlu0.b32.start [1/16] %v243, 128
  %537 = vxpose.xlu0.b32.cont [2/16] 0.0, 128
  %538 = vxpose.xlu0.b32.cont [3/16] 0.0, 128
  %539 = vxpose.xlu0.b32.cont [4/16] 0.0, 128
  %540 = vxpose.xlu0.b32.cont [5/16] 0.0, 128
  %541 = vxpose.xlu0.b32.cont [6/16] 0.0, 128
  %542 = vxpose.xlu0.b32.cont [7/16] 0.0, 128
  %543 = vxpose.xlu0.b32.cont [8/16] 0.0, 128
  %544 = vxpose.xlu0.b32.cont [9/16] 0.0, 128
  %545 = vxpose.xlu0.b32.cont [10/16] 0.0, 128
  %546 = vxpose.xlu0.b32.cont [11/16] 0.0, 128
  %547 = vxpose.xlu0.b32.cont [12/16] 0.0, 128
  %548 = vxpose.xlu0.b32.cont [13/16] 0.0, 128
  %549 = vxpose.xlu0.b32.cont [14/16] 0.0, 128
  %550 = vxpose.xlu0.b32.cont [15/16] 0.0, 128
  %551 = vxpose.xlu0.b32.end [16/16] 0.0, 128
  %v552 = vpop.trf.xlu0
  %v553 = vpop.trf.xlu0
  %v554 = vpop.trf.xlu0
  %v555 = vpop.trf.xlu0
  %v556 = vpop.trf.xlu0
  %v557 = vpop.trf.xlu0
  %v558 = vpop.trf.xlu0
  %v559 = vpop.trf.xlu0
  %v560 = vpop.trf.xlu0
  %v561 = vpop.trf.xlu0
  %v562 = vpop.trf.xlu0
  %v563 = vpop.trf.xlu0
  %v564 = vpop.trf.xlu0
  %v565 = vpop.trf.xlu0
  %v566 = vpop.trf.xlu0
  %v567 = vpop.trf.xlu0
  %568 = vxpose.xlu0.b32.start [1/16] %v248, 128
  %569 = vxpose.xlu0.b32.cont [2/16] 0.0, 128
  %570 = vxpose.xlu0.b32.cont [3/16] 0.0, 128
  %571 = vxpose.xlu0.b32.cont [4/16] 0.0, 128
  %572 = vxpose.xlu0.b32.cont [5/16] 0.0, 128
  %573 = vxpose.xlu0.b32.cont [6/16] 0.0, 128
  %574 = vxpose.xlu0.b32.cont [7/16] 0.0, 128
  %575 = vxpose.xlu0.b32.cont [8/16] 0.0, 128
  %576 = vxpose.xlu0.b32.cont [9/16] 0.0, 128
  %577 = vxpose.xlu0.b32.cont [10/16] 0.0, 128
  %578 = vxpose.xlu0.b32.cont [11/16] 0.0, 128
  %579 = vxpose.xlu0.b32.cont [12/16] 0.0, 128
  %580 = vxpose.xlu0.b32.cont [13/16] 0.0, 128
  %581 = vxpose.xlu0.b32.cont [14/16] 0.0, 128
  %582 = vxpose.xlu0.b32.cont [15/16] 0.0, 128
  %583 = vxpose.xlu0.b32.end [16/16] 0.0, 128
  %v584 = vpop.trf.xlu0
  %v585 = vpop.trf.xlu0
  %v586 = vpop.trf.xlu0
  %v587 = vpop.trf.xlu0
  %v588 = vpop.trf.xlu0
  %v589 = vpop.trf.xlu0
  %v590 = vpop.trf.xlu0
  %v591 = vpop.trf.xlu0
  %v592 = vpop.trf.xlu0
  %v593 = vpop.trf.xlu0
  %v594 = vpop.trf.xlu0
  %v595 = vpop.trf.xlu0
  %v596 = vpop.trf.xlu0
  %v597 = vpop.trf.xlu0
  %v598 = vpop.trf.xlu0
  %v599 = vpop.trf.xlu0
  %600 = vxpose.xlu0.b32.start [1/16] %v253, 128
  %601 = vxpose.xlu0.b32.cont [2/16] 0.0, 128
  %602 = vxpose.xlu0.b32.cont [3/16] 0.0, 128
  %603 = vxpose.xlu0.b32.cont [4/16] 0.0, 128
  %604 = vxpose.xlu0.b32.cont [5/16] 0.0, 128
  %605 = vxpose.xlu0.b32.cont [6/16] 0.0, 128
  %606 = vxpose.xlu0.b32.cont [7/16] 0.0, 128
  %607 = vxpose.xlu0.b32.cont [8/16] 0.0, 128
  %608 = vxpose.xlu0.b32.cont [9/16] 0.0, 128
  %609 = vxpose.xlu0.b32.cont [10/16] 0.0, 128
  %610 = vxpose.xlu0.b32.cont [11/16] 0.0, 128
  %611 = vxpose.xlu0.b32.cont [12/16] 0.0, 128
  %612 = vxpose.xlu0.b32.cont [13/16] 0.0, 128
  %613 = vxpose.xlu0.b32.cont [14/16] 0.0, 128
  %614 = vxpose.xlu0.b32.cont [15/16] 0.0, 128
  %615 = vxpose.xlu0.b32.end [16/16] 0.0, 128
  %v616 = vpop.trf.xlu0
  %v617 = vpop.trf.xlu0
  %v618 = vpop.trf.xlu0
  %v619 = vpop.trf.xlu0
  %v620 = vpop.trf.xlu0
  %v621 = vpop.trf.xlu0
  %v622 = vpop.trf.xlu0
  %v623 = vpop.trf.xlu0
  %v624 = vpop.trf.xlu0
  %v625 = vpop.trf.xlu0
  %v626 = vpop.trf.xlu0
  %v627 = vpop.trf.xlu0
  %v628 = vpop.trf.xlu0
  %v629 = vpop.trf.xlu0
  %v630 = vpop.trf.xlu0
  %v631 = vpop.trf.xlu0
  %632 = vxpose.xlu0.b32.start [1/16] %v258, 128
  %633 = vxpose.xlu0.b32.cont [2/16] 0.0, 128
  %634 = vxpose.xlu0.b32.cont [3/16] 0.0, 128
  %635 = vxpose.xlu0.b32.cont [4/16] 0.0, 128
  %636 = vxpose.xlu0.b32.cont [5/16] 0.0, 128
  %637 = vxpose.xlu0.b32.cont [6/16] 0.0, 128
  %638 = vxpose.xlu0.b32.cont [7/16] 0.0, 128
  %639 = vxpose.xlu0.b32.cont [8/16] 0.0, 128
  %640 = vxpose.xlu0.b32.cont [9/16] 0.0, 128
  %641 = vxpose.xlu0.b32.cont [10/16] 0.0, 128
  %642 = vxpose.xlu0.b32.cont [11/16] 0.0, 128
  %643 = vxpose.xlu0.b32.cont [12/16] 0.0, 128
  %644 = vxpose.xlu0.b32.cont [13/16] 0.0, 128
  %645 = vxpose.xlu0.b32.cont [14/16] 0.0, 128
  %646 = vxpose.xlu0.b32.cont [15/16] 0.0, 128
  %647 = vxpose.xlu0.b32.end [16/16] 0.0, 128
  %v648 = vpop.trf.xlu0
  %v649 = vpop.trf.xlu0
  %v650 = vpop.trf.xlu0
  %v651 = vpop.trf.xlu0
  %v652 = vpop.trf.xlu0
  %v653 = vpop.trf.xlu0
  %v654 = vpop.trf.xlu0
  %v655 = vpop.trf.xlu0
  %v656 = vpop.trf.xlu0
  %v657 = vpop.trf.xlu0
  %v658 = vpop.trf.xlu0
  %v659 = vpop.trf.xlu0
  %v660 = vpop.trf.xlu0
  %v661 = vpop.trf.xlu0
  %v662 = vpop.trf.xlu0
  %v663 = vpop.trf.xlu0
  %664 = vxpose.xlu0.b32.start [1/16] %v263, 128
  %665 = vxpose.xlu0.b32.cont [2/16] 0.0, 128
  %666 = vxpose.xlu0.b32.cont [3/16] 0.0, 128
  %667 = vxpose.xlu0.b32.cont [4/16] 0.0, 128
  %668 = vxpose.xlu0.b32.cont [5/16] 0.0, 128
  %669 = vxpose.xlu0.b32.cont [6/16] 0.0, 128
  %670 = vxpose.xlu0.b32.cont [7/16] 0.0, 128
  %671 = vxpose.xlu0.b32.cont [8/16] 0.0, 128
  %672 = vxpose.xlu0.b32.cont [9/16] 0.0, 128
  %673 = vxpose.xlu0.b32.cont [10/16] 0.0, 128
  %674 = vxpose.xlu0.b32.cont [11/16] 0.0, 128
  %675 = vxpose.xlu0.b32.cont [12/16] 0.0, 128
  %676 = vxpose.xlu0.b32.cont [13/16] 0.0, 128
  %677 = vxpose.xlu0.b32.cont [14/16] 0.0, 128
  %678 = vxpose.xlu0.b32.cont [15/16] 0.0, 128
  %679 = vxpose.xlu0.b32.end [16/16] 0.0, 128
  %v680 = vpop.trf.xlu0
  %v681 = vpop.trf.xlu0
  %v682 = vpop.trf.xlu0
  %v683 = vpop.trf.xlu0
  %v684 = vpop.trf.xlu0
  %v685 = vpop.trf.xlu0
  %v686 = vpop.trf.xlu0
  %v687 = vpop.trf.xlu0
  %v688 = vpop.trf.xlu0
  %v689 = vpop.trf.xlu0
  %v690 = vpop.trf.xlu0
  %v691 = vpop.trf.xlu0
  %v692 = vpop.trf.xlu0
  %v693 = vpop.trf.xlu0
  %v694 = vpop.trf.xlu0
  %v695 = vpop.trf.xlu0
  %696 = vxpose.xlu0.b32.start [1/16] %v268, 128
  %697 = vxpose.xlu0.b32.cont [2/16] 0.0, 128
  %698 = vxpose.xlu0.b32.cont [3/16] 0.0, 128
  %699 = vxpose.xlu0.b32.cont [4/16] 0.0, 128
  %700 = vxpose.xlu0.b32.cont [5/16] 0.0, 128
  %701 = vxpose.xlu0.b32.cont [6/16] 0.0, 128
  %702 = vxpose.xlu0.b32.cont [7/16] 0.0, 128
  %703 = vxpose.xlu0.b32.cont [8/16] 0.0, 128
  %704 = vxpose.xlu0.b32.cont [9/16] 0.0, 128
  %705 = vxpose.xlu0.b32.cont [10/16] 0.0, 128
  %706 = vxpose.xlu0.b32.cont [11/16] 0.0, 128
  %707 = vxpose.xlu0.b32.cont [12/16] 0.0, 128
  %708 = vxpose.xlu0.b32.cont [13/16] 0.0, 128
  %709 = vxpose.xlu0.b32.cont [14/16] 0.0, 128
  %710 = vxpose.xlu0.b32.cont [15/16] 0.0, 128
  %711 = vxpose.xlu0.b32.end [16/16] 0.0, 128
  %v712 = vpop.trf.xlu0
  %v713 = vpop.trf.xlu0
  %v714 = vpop.trf.xlu0
  %v715 = vpop.trf.xlu0
  %v716 = vpop.trf.xlu0
  %v717 = vpop.trf.xlu0
  %v718 = vpop.trf.xlu0
  %v719 = vpop.trf.xlu0
  %v720 = vpop.trf.xlu0
  %v721 = vpop.trf.xlu0
  %v722 = vpop.trf.xlu0
  %v723 = vpop.trf.xlu0
  %v724 = vpop.trf.xlu0
  %v725 = vpop.trf.xlu0
  %v726 = vpop.trf.xlu0
  %v727 = vpop.trf.xlu0
  %728 = vxpose.xlu0.b32.start [1/16] %v273, 128
  %729 = vxpose.xlu0.b32.cont [2/16] 0.0, 128
  %730 = vxpose.xlu0.b32.cont [3/16] 0.0, 128
  %731 = vxpose.xlu0.b32.cont [4/16] 0.0, 128
  %732 = vxpose.xlu0.b32.cont [5/16] 0.0, 128
  %733 = vxpose.xlu0.b32.cont [6/16] 0.0, 128
  %734 = vxpose.xlu0.b32.cont [7/16] 0.0, 128
  %735 = vxpose.xlu0.b32.cont [8/16] 0.0, 128
  %736 = vxpose.xlu0.b32.cont [9/16] 0.0, 128
  %737 = vxpose.xlu0.b32.cont [10/16] 0.0, 128
  %738 = vxpose.xlu0.b32.cont [11/16] 0.0, 128
  %739 = vxpose.xlu0.b32.cont [12/16] 0.0, 128
  %740 = vxpose.xlu0.b32.cont [13/16] 0.0, 128
  %741 = vxpose.xlu0.b32.cont [14/16] 0.0, 128
  %742 = vxpose.xlu0.b32.cont [15/16] 0.0, 128
  %743 = vxpose.xlu0.b32.end [16/16] 0.0, 128
  %v744 = vpop.trf.xlu0
  %v745 = vpop.trf.xlu0
  %v746 = vpop.trf.xlu0
  %v747 = vpop.trf.xlu0
  %v748 = vpop.trf.xlu0
  %v749 = vpop.trf.xlu0
  %v750 = vpop.trf.xlu0
  %v751 = vpop.trf.xlu0
  %v752 = vpop.trf.xlu0
  %v753 = vpop.trf.xlu0
  %v754 = vpop.trf.xlu0
  %v755 = vpop.trf.xlu0
  %v756 = vpop.trf.xlu0
  %v757 = vpop.trf.xlu0
  %v758 = vpop.trf.xlu0
  %v759 = vpop.trf.xlu0
  %760 = vxpose.xlu0.b32.start [1/16] %v278, 128
  %761 = vxpose.xlu0.b32.cont [2/16] 0.0, 128
  %762 = vxpose.xlu0.b32.cont [3/16] 0.0, 128
  %763 = vxpose.xlu0.b32.cont [4/16] 0.0, 128
  %764 = vxpose.xlu0.b32.cont [5/16] 0.0, 128
  %765 = vxpose.xlu0.b32.cont [6/16] 0.0, 128
  %766 = vxpose.xlu0.b32.cont [7/16] 0.0, 128
  %767 = vxpose.xlu0.b32.cont [8/16] 0.0, 128
  %768 = vxpose.xlu0.b32.cont [9/16] 0.0, 128
  %769 = vxpose.xlu0.b32.cont [10/16] 0.0, 128
  %770 = vxpose.xlu0.b32.cont [11/16] 0.0, 128
  %771 = vxpose.xlu0.b32.cont [12/16] 0.0, 128
  %772 = vxpose.xlu0.b32.cont [13/16] 0.0, 128
  %773 = vxpose.xlu0.b32.cont [14/16] 0.0, 128
  %774 = vxpose.xlu0.b32.cont [15/16] 0.0, 128
  %775 = vxpose.xlu0.b32.end [16/16] 0.0, 128
  %v776 = vpop.trf.xlu0
  %v777 = vpop.trf.xlu0
  %v778 = vpop.trf.xlu0
  %v779 = vpop.trf.xlu0
  %v780 = vpop.trf.xlu0
  %v781 = vpop.trf.xlu0
  %v782 = vpop.trf.xlu0
  %v783 = vpop.trf.xlu0
  %v784 = vpop.trf.xlu0
  %v785 = vpop.trf.xlu0
  %v786 = vpop.trf.xlu0
  %v787 = vpop.trf.xlu0
  %v788 = vpop.trf.xlu0
  %v789 = vpop.trf.xlu0
  %v790 = vpop.trf.xlu0
  %v791 = vpop.trf.xlu0
  %792 = vxpose.xlu0.b32.start [1/16] %v283, 128
  %793 = vxpose.xlu0.b32.cont [2/16] 0.0, 128
  %794 = vxpose.xlu0.b32.cont [3/16] 0.0, 128
  %795 = vxpose.xlu0.b32.cont [4/16] 0.0, 128
  %796 = vxpose.xlu0.b32.cont [5/16] 0.0, 128
  %797 = vxpose.xlu0.b32.cont [6/16] 0.0, 128
  %798 = vxpose.xlu0.b32.cont [7/16] 0.0, 128
  %799 = vxpose.xlu0.b32.cont [8/16] 0.0, 128
  %800 = vxpose.xlu0.b32.cont [9/16] 0.0, 128
  %801 = vxpose.xlu0.b32.cont [10/16] 0.0, 128
  %802 = vxpose.xlu0.b32.cont [11/16] 0.0, 128
  %803 = vxpose.xlu0.b32.cont [12/16] 0.0, 128
  %804 = vxpose.xlu0.b32.cont [13/16] 0.0, 128
  %805 = vxpose.xlu0.b32.cont [14/16] 0.0, 128
  %806 = vxpose.xlu0.b32.cont [15/16] 0.0, 128
  %807 = vxpose.xlu0.b32.end [16/16] 0.0, 128
  %v808 = vpop.trf.xlu0
  %v809 = vpop.trf.xlu0
  %v810 = vpop.trf.xlu0
  %v811 = vpop.trf.xlu0
  %v812 = vpop.trf.xlu0
  %v813 = vpop.trf.xlu0
  %v814 = vpop.trf.xlu0
  %v815 = vpop.trf.xlu0
  %v816 = vpop.trf.xlu0
  %v817 = vpop.trf.xlu0
  %v818 = vpop.trf.xlu0
  %v819 = vpop.trf.xlu0
  %v820 = vpop.trf.xlu0
  %v821 = vpop.trf.xlu0
  %v822 = vpop.trf.xlu0
  %v823 = vpop.trf.xlu0
  %824 = vxpose.xlu0.b32.start [1/16] %v288, 128
  %825 = vxpose.xlu0.b32.cont [2/16] 0.0, 128
  %826 = vxpose.xlu0.b32.cont [3/16] 0.0, 128
  %827 = vxpose.xlu0.b32.cont [4/16] 0.0, 128
  %828 = vxpose.xlu0.b32.cont [5/16] 0.0, 128
  %829 = vxpose.xlu0.b32.cont [6/16] 0.0, 128
  %830 = vxpose.xlu0.b32.cont [7/16] 0.0, 128
  %831 = vxpose.xlu0.b32.cont [8/16] 0.0, 128
  %832 = vxpose.xlu0.b32.cont [9/16] 0.0, 128
  %833 = vxpose.xlu0.b32.cont [10/16] 0.0, 128
  %834 = vxpose.xlu0.b32.cont [11/16] 0.0, 128
  %835 = vxpose.xlu0.b32.cont [12/16] 0.0, 128
  %836 = vxpose.xlu0.b32.cont [13/16] 0.0, 128
  %837 = vxpose.xlu0.b32.cont [14/16] 0.0, 128
  %838 = vxpose.xlu0.b32.cont [15/16] 0.0, 128
  %839 = vxpose.xlu0.b32.end [16/16] 0.0, 128
  %v840 = vpop.trf.xlu0
  %v841 = vpop.trf.xlu0
  %v842 = vpop.trf.xlu0
  %v843 = vpop.trf.xlu0
  %v844 = vpop.trf.xlu0
  %v845 = vpop.trf.xlu0
  %v846 = vpop.trf.xlu0
  %v847 = vpop.trf.xlu0
  %v848 = vpop.trf.xlu0
  %v849 = vpop.trf.xlu0
  %v850 = vpop.trf.xlu0
  %v851 = vpop.trf.xlu0
  %v852 = vpop.trf.xlu0
  %v853 = vpop.trf.xlu0
  %v854 = vpop.trf.xlu0
  %v855 = vpop.trf.xlu0
  %856 = vxpose.xlu0.b32.start [1/16] %v293, 128
  %857 = vxpose.xlu0.b32.cont [2/16] 0.0, 128
  %858 = vxpose.xlu0.b32.cont [3/16] 0.0, 128
  %859 = vxpose.xlu0.b32.cont [4/16] 0.0, 128
  %860 = vxpose.xlu0.b32.cont [5/16] 0.0, 128
  %861 = vxpose.xlu0.b32.cont [6/16] 0.0, 128
  %862 = vxpose.xlu0.b32.cont [7/16] 0.0, 128
  %863 = vxpose.xlu0.b32.cont [8/16] 0.0, 128
  %864 = vxpose.xlu0.b32.cont [9/16] 0.0, 128
  %865 = vxpose.xlu0.b32.cont [10/16] 0.0, 128
  %866 = vxpose.xlu0.b32.cont [11/16] 0.0, 128
  %867 = vxpose.xlu0.b32.cont [12/16] 0.0, 128
  %868 = vxpose.xlu0.b32.cont [13/16] 0.0, 128
  %869 = vxpose.xlu0.b32.cont [14/16] 0.0, 128
  %870 = vxpose.xlu0.b32.cont [15/16] 0.0, 128
  %871 = vxpose.xlu0.b32.end [16/16] 0.0, 128
  %v872 = vpop.trf.xlu0
  %v873 = vpop.trf.xlu0
  %v874 = vpop.trf.xlu0
  %v875 = vpop.trf.xlu0
  %v876 = vpop.trf.xlu0
  %v877 = vpop.trf.xlu0
  %v878 = vpop.trf.xlu0
  %v879 = vpop.trf.xlu0
  %v880 = vpop.trf.xlu0
  %v881 = vpop.trf.xlu0
  %v882 = vpop.trf.xlu0
  %v883 = vpop.trf.xlu0
  %v884 = vpop.trf.xlu0
  %v885 = vpop.trf.xlu0
  %v886 = vpop.trf.xlu0
  %v887 = vpop.trf.xlu0
  %888 = vxpose.xlu0.b32.start [1/16] %v298, 128
  %889 = vxpose.xlu0.b32.cont [2/16] 0.0, 128
  %890 = vxpose.xlu0.b32.cont [3/16] 0.0, 128
  %891 = vxpose.xlu0.b32.cont [4/16] 0.0, 128
  %892 = vxpose.xlu0.b32.cont [5/16] 0.0, 128
  %893 = vxpose.xlu0.b32.cont [6/16] 0.0, 128
  %894 = vxpose.xlu0.b32.cont [7/16] 0.0, 128
  %895 = vxpose.xlu0.b32.cont [8/16] 0.0, 128
  %896 = vxpose.xlu0.b32.cont [9/16] 0.0, 128
  %897 = vxpose.xlu0.b32.cont [10/16] 0.0, 128
  %898 = vxpose.xlu0.b32.cont [11/16] 0.0, 128
  %899 = vxpose.xlu0.b32.cont [12/16] 0.0, 128
  %900 = vxpose.xlu0.b32.cont [13/16] 0.0, 128
  %901 = vxpose.xlu0.b32.cont [14/16] 0.0, 128
  %902 = vxpose.xlu0.b32.cont [15/16] 0.0, 128
  %903 = vxpose.xlu0.b32.end [16/16] 0.0, 128
  %v904 = vpop.trf.xlu0
  %v905 = vpop.trf.xlu0
  %v906 = vpop.trf.xlu0
  %v907 = vpop.trf.xlu0
  %v908 = vpop.trf.xlu0
  %v909 = vpop.trf.xlu0
  %v910 = vpop.trf.xlu0
  %v911 = vpop.trf.xlu0
  %v912 = vpop.trf.xlu0
  %v913 = vpop.trf.xlu0
  %v914 = vpop.trf.xlu0
  %v915 = vpop.trf.xlu0
  %v916 = vpop.trf.xlu0
  %v917 = vpop.trf.xlu0
  %v918 = vpop.trf.xlu0
  %v919 = vpop.trf.xlu0
  %920 = vxpose.xlu0.b32.start [1/16] %v303, 128
  %921 = vxpose.xlu0.b32.cont [2/16] 0.0, 128
  %922 = vxpose.xlu0.b32.cont [3/16] 0.0, 128
  %923 = vxpose.xlu0.b32.cont [4/16] 0.0, 128
  %924 = vxpose.xlu0.b32.cont [5/16] 0.0, 128
  %925 = vxpose.xlu0.b32.cont [6/16] 0.0, 128
  %926 = vxpose.xlu0.b32.cont [7/16] 0.0, 128
  %927 = vxpose.xlu0.b32.cont [8/16] 0.0, 128
  %928 = vxpose.xlu0.b32.cont [9/16] 0.0, 128
  %929 = vxpose.xlu0.b32.cont [10/16] 0.0, 128
  %930 = vxpose.xlu0.b32.cont [11/16] 0.0, 128
  %931 = vxpose.xlu0.b32.cont [12/16] 0.0, 128
  %932 = vxpose.xlu0.b32.cont [13/16] 0.0, 128
  %933 = vxpose.xlu0.b32.cont [14/16] 0.0, 128
  %934 = vxpose.xlu0.b32.cont [15/16] 0.0, 128
  %935 = vxpose.xlu0.b32.end [16/16] 0.0, 128
  %v936 = vpop.trf.xlu0
  %v937 = vpop.trf.xlu0
  %v938 = vpop.trf.xlu0
  %v939 = vpop.trf.xlu0
  %v940 = vpop.trf.xlu0
  %v941 = vpop.trf.xlu0
  %v942 = vpop.trf.xlu0
  %v943 = vpop.trf.xlu0
  %v944 = vpop.trf.xlu0
  %v945 = vpop.trf.xlu0
  %v946 = vpop.trf.xlu0
  %v947 = vpop.trf.xlu0
  %v948 = vpop.trf.xlu0
  %v949 = vpop.trf.xlu0
  %v950 = vpop.trf.xlu0
  %v951 = vpop.trf.xlu0
  %952 = vxpose.xlu0.b32.start [1/16] %v308, 128
  %953 = vxpose.xlu0.b32.cont [2/16] 0.0, 128
  %954 = vxpose.xlu0.b32.cont [3/16] 0.0, 128
  %955 = vxpose.xlu0.b32.cont [4/16] 0.0, 128
  %956 = vxpose.xlu0.b32.cont [5/16] 0.0, 128
  %957 = vxpose.xlu0.b32.cont [6/16] 0.0, 128
  %958 = vxpose.xlu0.b32.cont [7/16] 0.0, 128
  %959 = vxpose.xlu0.b32.cont [8/16] 0.0, 128
  %960 = vxpose.xlu0.b32.cont [9/16] 0.0, 128
  %961 = vxpose.xlu0.b32.cont [10/16] 0.0, 128
  %962 = vxpose.xlu0.b32.cont [11/16] 0.0, 128
  %963 = vxpose.xlu0.b32.cont [12/16] 0.0, 128
  %964 = vxpose.xlu0.b32.cont [13/16] 0.0, 128
  %965 = vxpose.xlu0.b32.cont [14/16] 0.0, 128
  %966 = vxpose.xlu0.b32.cont [15/16] 0.0, 128
  %967 = vxpose.xlu0.b32.end [16/16] 0.0, 128
  %v968 = vpop.trf.xlu0
  %v969 = vpop.trf.xlu0
  %v970 = vpop.trf.xlu0
  %v971 = vpop.trf.xlu0
  %v972 = vpop.trf.xlu0
  %v973 = vpop.trf.xlu0
  %v974 = vpop.trf.xlu0
  %v975 = vpop.trf.xlu0
  %v976 = vpop.trf.xlu0
  %v977 = vpop.trf.xlu0
  %v978 = vpop.trf.xlu0
  %v979 = vpop.trf.xlu0
  %v980 = vpop.trf.xlu0
  %v981 = vpop.trf.xlu0
  %v982 = vpop.trf.xlu0
  %v983 = vpop.trf.xlu0
  %984 = vxpose.xlu0.b32.start [1/16] %v313, 128
  %985 = vxpose.xlu0.b32.cont [2/16] 0.0, 128
  %986 = vxpose.xlu0.b32.cont [3/16] 0.0, 128
  %987 = vxpose.xlu0.b32.cont [4/16] 0.0, 128
  %988 = vxpose.xlu0.b32.cont [5/16] 0.0, 128
  %989 = vxpose.xlu0.b32.cont [6/16] 0.0, 128
  %990 = vxpose.xlu0.b32.cont [7/16] 0.0, 128
  %991 = vxpose.xlu0.b32.cont [8/16] 0.0, 128
  %992 = vxpose.xlu0.b32.cont [9/16] 0.0, 128
  %993 = vxpose.xlu0.b32.cont [10/16] 0.0, 128
  %994 = vxpose.xlu0.b32.cont [11/16] 0.0, 128
  %995 = vxpose.xlu0.b32.cont [12/16] 0.0, 128
  %996 = vxpose.xlu0.b32.cont [13/16] 0.0, 128
  %997 = vxpose.xlu0.b32.cont [14/16] 0.0, 128
  %998 = vxpose.xlu0.b32.cont [15/16] 0.0, 128
  %999 = vxpose.xlu0.b32.end [16/16] 0.0, 128
  %v1000 = vpop.trf.xlu0
  %v1001 = vpop.trf.xlu0
  %v1002 = vpop.trf.xlu0
  %v1003 = vpop.trf.xlu0
  %v1004 = vpop.trf.xlu0
  %v1005 = vpop.trf.xlu0
  %v1006 = vpop.trf.xlu0
  %v1007 = vpop.trf.xlu0
  %v1008 = vpop.trf.xlu0
  %v1009 = vpop.trf.xlu0
  %v1010 = vpop.trf.xlu0
  %v1011 = vpop.trf.xlu0
  %v1012 = vpop.trf.xlu0
  %v1013 = vpop.trf.xlu0
  %v1014 = vpop.trf.xlu0
  %v1015 = vpop.trf.xlu0
  %1016 = vxpose.xlu0.b32.start [1/16] %v318, 128
  %1017 = vxpose.xlu0.b32.cont [2/16] 0.0, 128
  %1018 = vxpose.xlu0.b32.cont [3/16] 0.0, 128
  %1019 = vxpose.xlu0.b32.cont [4/16] 0.0, 128
  %1020 = vxpose.xlu0.b32.cont [5/16] 0.0, 128
  %1021 = vxpose.xlu0.b32.cont [6/16] 0.0, 128
  %1022 = vxpose.xlu0.b32.cont [7/16] 0.0, 128
  %1023 = vxpose.xlu0.b32.cont [8/16] 0.0, 128
  %1024 = vxpose.xlu0.b32.cont [9/16] 0.0, 128
  %1025 = vxpose.xlu0.b32.cont [10/16] 0.0, 128
  %1026 = vxpose.xlu0.b32.cont [11/16] 0.0, 128
  %1027 = vxpose.xlu0.b32.cont [12/16] 0.0, 128
  %1028 = vxpose.xlu0.b32.cont [13/16] 0.0, 128
  %1029 = vxpose.xlu0.b32.cont [14/16] 0.0, 128
  %1030 = vxpose.xlu0.b32.cont [15/16] 0.0, 128
  %1031 = vxpose.xlu0.b32.end [16/16] 0.0, 128
  %v1032 = vpop.trf.xlu0
  %v1033 = vpop.trf.xlu0
  %v1034 = vpop.trf.xlu0
  %v1035 = vpop.trf.xlu0
  %v1036 = vpop.trf.xlu0
  %v1037 = vpop.trf.xlu0
  %v1038 = vpop.trf.xlu0
  %v1039 = vpop.trf.xlu0
  %v1040 = vpop.trf.xlu0
  %v1041 = vpop.trf.xlu0
  %v1042 = vpop.trf.xlu0
  %v1043 = vpop.trf.xlu0
  %v1044 = vpop.trf.xlu0
  %v1045 = vpop.trf.xlu0
  %v1046 = vpop.trf.xlu0
  %v1047 = vpop.trf.xlu0
  %1048 = vxpose.xlu0.b32.start [1/16] %v323, 128
  %1049 = vxpose.xlu0.b32.cont [2/16] 0.0, 128
  %1050 = vxpose.xlu0.b32.cont [3/16] 0.0, 128
  %1051 = vxpose.xlu0.b32.cont [4/16] 0.0, 128
  %1052 = vxpose.xlu0.b32.cont [5/16] 0.0, 128
  %1053 = vxpose.xlu0.b32.cont [6/16] 0.0, 128
  %1054 = vxpose.xlu0.b32.cont [7/16] 0.0, 128
  %1055 = vxpose.xlu0.b32.cont [8/16] 0.0, 128
  %1056 = vxpose.xlu0.b32.cont [9/16] 0.0, 128
  %1057 = vxpose.xlu0.b32.cont [10/16] 0.0, 128
  %1058 = vxpose.xlu0.b32.cont [11/16] 0.0, 128
  %1059 = vxpose.xlu0.b32.cont [12/16] 0.0, 128
  %1060 = vxpose.xlu0.b32.cont [13/16] 0.0, 128
  %1061 = vxpose.xlu0.b32.cont [14/16] 0.0, 128
  %1062 = vxpose.xlu0.b32.cont [15/16] 0.0, 128
  %1063 = vxpose.xlu0.b32.end [16/16] 0.0, 128
  %v1064 = vpop.trf.xlu0
  %v1065 = vpop.trf.xlu0
  %v1066 = vpop.trf.xlu0
  %v1067 = vpop.trf.xlu0
  %v1068 = vpop.trf.xlu0
  %v1069 = vpop.trf.xlu0
  %v1070 = vpop.trf.xlu0
  %v1071 = vpop.trf.xlu0
  %v1072 = vpop.trf.xlu0
  %v1073 = vpop.trf.xlu0
  %v1074 = vpop.trf.xlu0
  %v1075 = vpop.trf.xlu0
  %v1076 = vpop.trf.xlu0
  %v1077 = vpop.trf.xlu0
  %v1078 = vpop.trf.xlu0
  %v1079 = vpop.trf.xlu0
  %1080 = vxpose.xlu0.b32.start [1/16] %v328, 128
  %1081 = vxpose.xlu0.b32.cont [2/16] 0.0, 128
  %1082 = vxpose.xlu0.b32.cont [3/16] 0.0, 128
  %1083 = vxpose.xlu0.b32.cont [4/16] 0.0, 128
  %1084 = vxpose.xlu0.b32.cont [5/16] 0.0, 128
  %1085 = vxpose.xlu0.b32.cont [6/16] 0.0, 128
  %1086 = vxpose.xlu0.b32.cont [7/16] 0.0, 128
  %1087 = vxpose.xlu0.b32.cont [8/16] 0.0, 128
  %1088 = vxpose.xlu0.b32.cont [9/16] 0.0, 128
  %1089 = vxpose.xlu0.b32.cont [10/16] 0.0, 128
  %1090 = vxpose.xlu0.b32.cont [11/16] 0.0, 128
  %1091 = vxpose.xlu0.b32.cont [12/16] 0.0, 128
  %1092 = vxpose.xlu0.b32.cont [13/16] 0.0, 128
  %1093 = vxpose.xlu0.b32.cont [14/16] 0.0, 128
  %1094 = vxpose.xlu0.b32.cont [15/16] 0.0, 128
  %1095 = vxpose.xlu0.b32.end [16/16] 0.0, 128
  %v1096 = vpop.trf.xlu0
  %v1097 = vpop.trf.xlu0
  %v1098 = vpop.trf.xlu0
  %v1099 = vpop.trf.xlu0
  %v1100 = vpop.trf.xlu0
  %v1101 = vpop.trf.xlu0
  %v1102 = vpop.trf.xlu0
  %v1103 = vpop.trf.xlu0
  %v1104 = vpop.trf.xlu0
  %v1105 = vpop.trf.xlu0
  %v1106 = vpop.trf.xlu0
  %v1107 = vpop.trf.xlu0
  %v1108 = vpop.trf.xlu0
  %v1109 = vpop.trf.xlu0
  %v1110 = vpop.trf.xlu0
  %v1111 = vpop.trf.xlu0
  %1112 = vxpose.xlu0.b32.start [1/16] %v333, 128
  %1113 = vxpose.xlu0.b32.cont [2/16] 0.0, 128
  %1114 = vxpose.xlu0.b32.cont [3/16] 0.0, 128
  %1115 = vxpose.xlu0.b32.cont [4/16] 0.0, 128
  %1116 = vxpose.xlu0.b32.cont [5/16] 0.0, 128
  %1117 = vxpose.xlu0.b32.cont [6/16] 0.0, 128
  %1118 = vxpose.xlu0.b32.cont [7/16] 0.0, 128
  %1119 = vxpose.xlu0.b32.cont [8/16] 0.0, 128
  %1120 = vxpose.xlu0.b32.cont [9/16] 0.0, 128
  %1121 = vxpose.xlu0.b32.cont [10/16] 0.0, 128
  %1122 = vxpose.xlu0.b32.cont [11/16] 0.0, 128
  %1123 = vxpose.xlu0.b32.cont [12/16] 0.0, 128
  %1124 = vxpose.xlu0.b32.cont [13/16] 0.0, 128
  %1125 = vxpose.xlu0.b32.cont [14/16] 0.0, 128
  %1126 = vxpose.xlu0.b32.cont [15/16] 0.0, 128
  %1127 = vxpose.xlu0.b32.end [16/16] 0.0, 128
  %v1128 = vpop.trf.xlu0
  %v1129 = vpop.trf.xlu0
  %v1130 = vpop.trf.xlu0
  %v1131 = vpop.trf.xlu0
  %v1132 = vpop.trf.xlu0
  %v1133 = vpop.trf.xlu0
  %v1134 = vpop.trf.xlu0
  %v1135 = vpop.trf.xlu0
  %v1136 = vpop.trf.xlu0
  %v1137 = vpop.trf.xlu0
  %v1138 = vpop.trf.xlu0
  %v1139 = vpop.trf.xlu0
  %v1140 = vpop.trf.xlu0
  %v1141 = vpop.trf.xlu0
  %v1142 = vpop.trf.xlu0
  %v1143 = vpop.trf.xlu0
  %1144 = vxpose.xlu0.b32.start [1/16] %v338, 128
  %1145 = vxpose.xlu0.b32.cont [2/16] 0.0, 128
  %1146 = vxpose.xlu0.b32.cont [3/16] 0.0, 128
  %1147 = vxpose.xlu0.b32.cont [4/16] 0.0, 128
  %1148 = vxpose.xlu0.b32.cont [5/16] 0.0, 128
  %1149 = vxpose.xlu0.b32.cont [6/16] 0.0, 128
  %1150 = vxpose.xlu0.b32.cont [7/16] 0.0, 128
  %1151 = vxpose.xlu0.b32.cont [8/16] 0.0, 128
  %1152 = vxpose.xlu0.b32.cont [9/16] 0.0, 128
  %1153 = vxpose.xlu0.b32.cont [10/16] 0.0, 128
  %1154 = vxpose.xlu0.b32.cont [11/16] 0.0, 128
  %1155 = vxpose.xlu0.b32.cont [12/16] 0.0, 128
  %1156 = vxpose.xlu0.b32.cont [13/16] 0.0, 128
  %1157 = vxpose.xlu0.b32.cont [14/16] 0.0, 128
  %1158 = vxpose.xlu0.b32.cont [15/16] 0.0, 128
  %1159 = vxpose.xlu0.b32.end [16/16] 0.0, 128
  %v1160 = vpop.trf.xlu0
  %v1161 = vpop.trf.xlu0
  %v1162 = vpop.trf.xlu0
  %v1163 = vpop.trf.xlu0
  %v1164 = vpop.trf.xlu0
  %v1165 = vpop.trf.xlu0
  %v1166 = vpop.trf.xlu0
  %v1167 = vpop.trf.xlu0
  %v1168 = vpop.trf.xlu0
  %v1169 = vpop.trf.xlu0
  %v1170 = vpop.trf.xlu0
  %v1171 = vpop.trf.xlu0
  %v1172 = vpop.trf.xlu0
  %v1173 = vpop.trf.xlu0
  %v1174 = vpop.trf.xlu0
  %v1175 = vpop.trf.xlu0
  %1176 = vxpose.xlu0.b32.start [1/16] %v343, 128
  %1177 = vxpose.xlu0.b32.cont [2/16] 0.0, 128
  %1178 = vxpose.xlu0.b32.cont [3/16] 0.0, 128
  %1179 = vxpose.xlu0.b32.cont [4/16] 0.0, 128
  %1180 = vxpose.xlu0.b32.cont [5/16] 0.0, 128
  %1181 = vxpose.xlu0.b32.cont [6/16] 0.0, 128
  %1182 = vxpose.xlu0.b32.cont [7/16] 0.0, 128
  %1183 = vxpose.xlu0.b32.cont [8/16] 0.0, 128
  %1184 = vxpose.xlu0.b32.cont [9/16] 0.0, 128
  %1185 = vxpose.xlu0.b32.cont [10/16] 0.0, 128
  %1186 = vxpose.xlu0.b32.cont [11/16] 0.0, 128
  %1187 = vxpose.xlu0.b32.cont [12/16] 0.0, 128
  %1188 = vxpose.xlu0.b32.cont [13/16] 0.0, 128
  %1189 = vxpose.xlu0.b32.cont [14/16] 0.0, 128
  %1190 = vxpose.xlu0.b32.cont [15/16] 0.0, 128
  %1191 = vxpose.xlu0.b32.end [16/16] 0.0, 128
  %v1192 = vpop.trf.xlu0
  %v1193 = vpop.trf.xlu0
  %v1194 = vpop.trf.xlu0
  %v1195 = vpop.trf.xlu0
  %v1196 = vpop.trf.xlu0
  %v1197 = vpop.trf.xlu0
  %v1198 = vpop.trf.xlu0
  %v1199 = vpop.trf.xlu0
  %v1200 = vpop.trf.xlu0
  %v1201 = vpop.trf.xlu0
  %v1202 = vpop.trf.xlu0
  %v1203 = vpop.trf.xlu0
  %v1204 = vpop.trf.xlu0
  %v1205 = vpop.trf.xlu0
  %v1206 = vpop.trf.xlu0
  %v1207 = vpop.trf.xlu0
  %1208 = vxpose.xlu0.b32.start [1/16] %v348, 128
  %1209 = vxpose.xlu0.b32.cont [2/16] 0.0, 128
  %1210 = vxpose.xlu0.b32.cont [3/16] 0.0, 128
  %1211 = vxpose.xlu0.b32.cont [4/16] 0.0, 128
  %1212 = vxpose.xlu0.b32.cont [5/16] 0.0, 128
  %1213 = vxpose.xlu0.b32.cont [6/16] 0.0, 128
  %1214 = vxpose.xlu0.b32.cont [7/16] 0.0, 128
  %1215 = vxpose.xlu0.b32.cont [8/16] 0.0, 128
  %1216 = vxpose.xlu0.b32.cont [9/16] 0.0, 128
  %1217 = vxpose.xlu0.b32.cont [10/16] 0.0, 128
  %1218 = vxpose.xlu0.b32.cont [11/16] 0.0, 128
  %1219 = vxpose.xlu0.b32.cont [12/16] 0.0, 128
  %1220 = vxpose.xlu0.b32.cont [13/16] 0.0, 128
  %1221 = vxpose.xlu0.b32.cont [14/16] 0.0, 128
  %1222 = vxpose.xlu0.b32.cont [15/16] 0.0, 128
  %1223 = vxpose.xlu0.b32.end [16/16] 0.0, 128
  %v1224 = vpop.trf.xlu0
  %v1225 = vpop.trf.xlu0
  %v1226 = vpop.trf.xlu0
  %v1227 = vpop.trf.xlu0
  %v1228 = vpop.trf.xlu0
  %v1229 = vpop.trf.xlu0
  %v1230 = vpop.trf.xlu0
  %v1231 = vpop.trf.xlu0
  %v1232 = vpop.trf.xlu0
  %v1233 = vpop.trf.xlu0
  %v1234 = vpop.trf.xlu0
  %v1235 = vpop.trf.xlu0
  %v1236 = vpop.trf.xlu0
  %v1237 = vpop.trf.xlu0
  %v1238 = vpop.trf.xlu0
  %v1239 = vpop.trf.xlu0
  %1240 = vxpose.xlu0.b32.start [1/16] %v353, 128
  %1241 = vxpose.xlu0.b32.cont [2/16] 0.0, 128
  %1242 = vxpose.xlu0.b32.cont [3/16] 0.0, 128
  %1243 = vxpose.xlu0.b32.cont [4/16] 0.0, 128
  %1244 = vxpose.xlu0.b32.cont [5/16] 0.0, 128
  %1245 = vxpose.xlu0.b32.cont [6/16] 0.0, 128
  %1246 = vxpose.xlu0.b32.cont [7/16] 0.0, 128
  %1247 = vxpose.xlu0.b32.cont [8/16] 0.0, 128
  %1248 = vxpose.xlu0.b32.cont [9/16] 0.0, 128
  %1249 = vxpose.xlu0.b32.cont [10/16] 0.0, 128
  %1250 = vxpose.xlu0.b32.cont [11/16] 0.0, 128
  %1251 = vxpose.xlu0.b32.cont [12/16] 0.0, 128
  %1252 = vxpose.xlu0.b32.cont [13/16] 0.0, 128
  %1253 = vxpose.xlu0.b32.cont [14/16] 0.0, 128
  %1254 = vxpose.xlu0.b32.cont [15/16] 0.0, 128
  %1255 = vxpose.xlu0.b32.end [16/16] 0.0, 128
  %v1256 = vpop.trf.xlu0
  %v1257 = vpop.trf.xlu0
  %v1258 = vpop.trf.xlu0
  %v1259 = vpop.trf.xlu0
  %v1260 = vpop.trf.xlu0
  %v1261 = vpop.trf.xlu0
  %v1262 = vpop.trf.xlu0
  %v1263 = vpop.trf.xlu0
  %v1264 = vpop.trf.xlu0
  %v1265 = vpop.trf.xlu0
  %v1266 = vpop.trf.xlu0
  %v1267 = vpop.trf.xlu0
  %v1268 = vpop.trf.xlu0
  %v1269 = vpop.trf.xlu0
  %v1270 = vpop.trf.xlu0
  %v1271 = vpop.trf.xlu0
  %1272 = vxpose.xlu0.b32.start [1/16] %v358, 128
  %1273 = vxpose.xlu0.b32.cont [2/16] 0.0, 128
  %1274 = vxpose.xlu0.b32.cont [3/16] 0.0, 128
  %1275 = vxpose.xlu0.b32.cont [4/16] 0.0, 128
  %1276 = vxpose.xlu0.b32.cont [5/16] 0.0, 128
  %1277 = vxpose.xlu0.b32.cont [6/16] 0.0, 128
  %1278 = vxpose.xlu0.b32.cont [7/16] 0.0, 128
  %1279 = vxpose.xlu0.b32.cont [8/16] 0.0, 128
  %1280 = vxpose.xlu0.b32.cont [9/16] 0.0, 128
  %1281 = vxpose.xlu0.b32.cont [10/16] 0.0, 128
  %1282 = vxpose.xlu0.b32.cont [11/16] 0.0, 128
  %1283 = vxpose.xlu0.b32.cont [12/16] 0.0, 128
  %1284 = vxpose.xlu0.b32.cont [13/16] 0.0, 128
  %1285 = vxpose.xlu0.b32.cont [14/16] 0.0, 128
  %1286 = vxpose.xlu0.b32.cont [15/16] 0.0, 128
  %1287 = vxpose.xlu0.b32.end [16/16] 0.0, 128
  %v1288 = vpop.trf.xlu0
  %v1289 = vpop.trf.xlu0
  %v1290 = vpop.trf.xlu0
  %v1291 = vpop.trf.xlu0
  %v1292 = vpop.trf.xlu0
  %v1293 = vpop.trf.xlu0
  %v1294 = vpop.trf.xlu0
  %v1295 = vpop.trf.xlu0
  %v1296 = vpop.trf.xlu0
  %v1297 = vpop.trf.xlu0
  %v1298 = vpop.trf.xlu0
  %v1299 = vpop.trf.xlu0
  %v1300 = vpop.trf.xlu0
  %v1301 = vpop.trf.xlu0
  %v1302 = vpop.trf.xlu0
  %v1303 = vpop.trf.xlu0
  %1304 = vxpose.xlu0.b32.start [1/16] %v363, 128
  %1305 = vxpose.xlu0.b32.cont [2/16] 0.0, 128
  %1306 = vxpose.xlu0.b32.cont [3/16] 0.0, 128
  %1307 = vxpose.xlu0.b32.cont [4/16] 0.0, 128
  %1308 = vxpose.xlu0.b32.cont [5/16] 0.0, 128
  %1309 = vxpose.xlu0.b32.cont [6/16] 0.0, 128
  %1310 = vxpose.xlu0.b32.cont [7/16] 0.0, 128
  %1311 = vxpose.xlu0.b32.cont [8/16] 0.0, 128
  %1312 = vxpose.xlu0.b32.cont [9/16] 0.0, 128
  %1313 = vxpose.xlu0.b32.cont [10/16] 0.0, 128
  %1314 = vxpose.xlu0.b32.cont [11/16] 0.0, 128
  %1315 = vxpose.xlu0.b32.cont [12/16] 0.0, 128
  %1316 = vxpose.xlu0.b32.cont [13/16] 0.0, 128
  %1317 = vxpose.xlu0.b32.cont [14/16] 0.0, 128
  %1318 = vxpose.xlu0.b32.cont [15/16] 0.0, 128
  %1319 = vxpose.xlu0.b32.end [16/16] 0.0, 128
  %v1320 = vpop.trf.xlu0
  %v1321 = vpop.trf.xlu0
  %v1322 = vpop.trf.xlu0
  %v1323 = vpop.trf.xlu0
  %v1324 = vpop.trf.xlu0
  %v1325 = vpop.trf.xlu0
  %v1326 = vpop.trf.xlu0
  %v1327 = vpop.trf.xlu0
  %v1328 = vpop.trf.xlu0
  %v1329 = vpop.trf.xlu0
  %v1330 = vpop.trf.xlu0
  %v1331 = vpop.trf.xlu0
  %v1332 = vpop.trf.xlu0
  %v1333 = vpop.trf.xlu0
  %v1334 = vpop.trf.xlu0
  %v1335 = vpop.trf.xlu0
  %1336 = vxpose.xlu0.b32.start [1/16] %v368, 128
  %1337 = vxpose.xlu0.b32.cont [2/16] 0.0, 128
  %1338 = vxpose.xlu0.b32.cont [3/16] 0.0, 128
  %1339 = vxpose.xlu0.b32.cont [4/16] 0.0, 128
  %1340 = vxpose.xlu0.b32.cont [5/16] 0.0, 128
  %1341 = vxpose.xlu0.b32.cont [6/16] 0.0, 128
  %1342 = vxpose.xlu0.b32.cont [7/16] 0.0, 128
  %1343 = vxpose.xlu0.b32.cont [8/16] 0.0, 128
  %1344 = vxpose.xlu0.b32.cont [9/16] 0.0, 128
  %1345 = vxpose.xlu0.b32.cont [10/16] 0.0, 128
  %1346 = vxpose.xlu0.b32.cont [11/16] 0.0, 128
  %1347 = vxpose.xlu0.b32.cont [12/16] 0.0, 128
  %1348 = vxpose.xlu0.b32.cont [13/16] 0.0, 128
  %1349 = vxpose.xlu0.b32.cont [14/16] 0.0, 128
  %1350 = vxpose.xlu0.b32.cont [15/16] 0.0, 128
  %1351 = vxpose.xlu0.b32.end [16/16] 0.0, 128
  %v1352 = vpop.trf.xlu0
  %v1353 = vpop.trf.xlu0
  %v1354 = vpop.trf.xlu0
  %v1355 = vpop.trf.xlu0
  %v1356 = vpop.trf.xlu0
  %v1357 = vpop.trf.xlu0
  %v1358 = vpop.trf.xlu0
  %v1359 = vpop.trf.xlu0
  %v1360 = vpop.trf.xlu0
  %v1361 = vpop.trf.xlu0
  %v1362 = vpop.trf.xlu0
  %v1363 = vpop.trf.xlu0
  %v1364 = vpop.trf.xlu0
  %v1365 = vpop.trf.xlu0
  %v1366 = vpop.trf.xlu0
  %v1367 = vpop.trf.xlu0
  %1368 = vxpose.xlu0.b32.start [1/16] %v373, 128
  %1369 = vxpose.xlu0.b32.cont [2/16] 0.0, 128
  %1370 = vxpose.xlu0.b32.cont [3/16] 0.0, 128
  %1371 = vxpose.xlu0.b32.cont [4/16] 0.0, 128
  %1372 = vxpose.xlu0.b32.cont [5/16] 0.0, 128
  %1373 = vxpose.xlu0.b32.cont [6/16] 0.0, 128
  %1374 = vxpose.xlu0.b32.cont [7/16] 0.0, 128
  %1375 = vxpose.xlu0.b32.cont [8/16] 0.0, 128
  %1376 = vxpose.xlu0.b32.cont [9/16] 0.0, 128
  %1377 = vxpose.xlu0.b32.cont [10/16] 0.0, 128
  %1378 = vxpose.xlu0.b32.cont [11/16] 0.0, 128
  %1379 = vxpose.xlu0.b32.cont [12/16] 0.0, 128
  %1380 = vxpose.xlu0.b32.cont [13/16] 0.0, 128
  %1381 = vxpose.xlu0.b32.cont [14/16] 0.0, 128
  %1382 = vxpose.xlu0.b32.cont [15/16] 0.0, 128
  %1383 = vxpose.xlu0.b32.end [16/16] 0.0, 128
  %v1384 = vpop.trf.xlu0
  %v1385 = vpop.trf.xlu0
  %v1386 = vpop.trf.xlu0
  %v1387 = vpop.trf.xlu0
  %v1388 = vpop.trf.xlu0
  %v1389 = vpop.trf.xlu0
  %v1390 = vpop.trf.xlu0
  %v1391 = vpop.trf.xlu0
  %v1392 = vpop.trf.xlu0
  %v1393 = vpop.trf.xlu0
  %v1394 = vpop.trf.xlu0
  %v1395 = vpop.trf.xlu0
  %v1396 = vpop.trf.xlu0
  %v1397 = vpop.trf.xlu0
  %v1398 = vpop.trf.xlu0
  %v1399 = vpop.trf.xlu0
  %v1400 = vld [vmem:[%s1] sm:$0xff]
  %v1433 = vcombine.low %v392, %v424
  %v1434 = vcombine.low %v456, %v488
  %v1435 = vcombine.low %v520, %v552
  %v1436 = vcombine.low %v584, %v616
  %v1437 = vcombine.low %v648, %v680
  %v1438 = vcombine.low %v712, %v744
  %v1439 = vcombine.low %v776, %v808
  %v1440 = vcombine.low %v840, %v872
  %v1441 = vcombine.low %v904, %v936
  %v1442 = vcombine.low %v968, %v1000
  %v1443 = vcombine.low %v1032, %v1064
  %v1444 = vcombine.low %v1096, %v1128
  %v1445 = vcombine.low %v1160, %v1192
  %v1446 = vcombine.low %v1224, %v1256
  %v1447 = vcombine.low %v1288, %v1320
  %v1448 = vcombine.low %v1352, %v1384
  %vm1449 = vcmask 64512
  %v1450 = vsel %vm1449, %v1433, 0
  %v1452 = vsel %vm1449, %v1434, 0
  %v1454 = vsel %vm1449, %v1435, 0
  %v1456 = vsel %vm1449, %v1436, 0
  %v1458 = vsel %vm1449, %v1437, 0
  %v1460 = vsel %vm1449, %v1438, 0
  %v1462 = vsel %vm1449, %v1439, 0
  %v1464 = vsel %vm1449, %v1440, 0
  %v1466 = vsel %vm1449, %v1441, 0
  %v1468 = vsel %vm1449, %v1442, 0
  %v1470 = vsel %vm1449, %v1443, 0
  %v1472 = vsel %vm1449, %v1444, 0
  %v1474 = vsel %vm1449, %v1445, 0
  %v1476 = vsel %vm1449, %v1446, 0
  %v1478 = vsel %vm1449, %v1447, 0
  %v1480 = vsel %vm1449, %v1448, 0
  %1482 = vmatprep.subr.mxu0 0.0
  %1483 = vmatpush1.msra.mxu0 %v1400
  %1484 = vmatprep.subr.mxu0 0.0
  %1485 = vmatpush1.msra.mxu0 0.0
  %1486 = vmatprep.subr.mxu0 0.0
  %1487 = vmatpush1.msra.mxu0 0.0
  %1488 = vmatprep.subr.mxu0 0.0
  %1489 = vmatpush1.msra.mxu0 0.0
  %1490 = vmatprep.subr.mxu0 0.0
  %1491 = vmatpush1.msra.mxu0 0.0
  %1492 = vmatprep.subr.mxu0 0.0
  %1493 = vmatpush1.msra.mxu0 0.0
  %1494 = vmatprep.subr.mxu0 0.0
  %1495 = vmatpush1.msra.mxu0 0.0
  %1496 = vmatprep.subr.mxu0 0.0
  %1497 = vmatpush1.msra.mxu0 0.0
  %1498 = vmatprep.subr.mxu0 0.0
  %1499 = vmatpush1.msra.mxu0 0.0
  %1500 = vmatprep.subr.mxu0 0.0
  %1501 = vmatpush1.msra.mxu0 0.0
  %1502 = vmatprep.subr.mxu0 0.0
  %1503 = vmatpush1.msra.mxu0 0.0
  %1504 = vmatprep.subr.mxu0 0.0
  %1505 = vmatpush1.msra.mxu0 0.0
  %1506 = vmatprep.subr.mxu0 0.0
  %1507 = vmatpush1.msra.mxu0 0.0
  %1508 = vmatprep.subr.mxu0 0.0
  %1509 = vmatpush1.msra.mxu0 0.0
  %1510 = vmatprep.subr.mxu0 0.0
  %1511 = vmatpush1.msra.mxu0 0.0
  %1512 = vmatprep.subr.mxu0 0.0
  %1513 = vmatpush1.msra.mxu0 0.0
  %1514 = vmatprep.subr.mxu0 0.0
  %1515 = vmatpush1.msra.mxu0 0.0
  %1516 = vmatprep.subr.mxu0 0.0
  %1517 = vmatpush1.msra.mxu0 0.0
  %1518 = vmatprep.subr.mxu0 0.0
  %1519 = vmatpush1.msra.mxu0 0.0
  %1520 = vmatprep.subr.mxu0 0.0
  %1521 = vmatpush1.msra.mxu0 0.0
  %1522 = vmatprep.subr.mxu0 0.0
  %1523 = vmatpush1.msra.mxu0 0.0
  %1524 = vmatprep.subr.mxu0 0.0
  %1525 = vmatpush1.msra.mxu0 0.0
  %1526 = vmatprep.subr.mxu0 0.0
  %1527 = vmatpush1.msra.mxu0 0.0
  %1528 = vmatprep.subr.mxu0 0.0
  %1529 = vmatpush1.msra.mxu0 0.0
  %1530 = vmatprep.subr.mxu0 0.0
  %1531 = vmatpush1.msra.mxu0 0.0
  %1532 = vmatprep.subr.mxu0 0.0
  %1533 = vmatpush1.msra.mxu0 0.0
  %1534 = vmatprep.subr.mxu0 0.0
  %1535 = vmatpush1.msra.mxu0 0.0
  %1536 = vmatprep.subr.mxu0 0.0
  %1537 = vmatpush1.msra.mxu0 0.0
  %1538 = vmatprep.subr.mxu0 0.0
  %1539 = vmatpush1.msra.mxu0 0.0
  %1540 = vmatprep.subr.mxu0 0.0
  %1541 = vmatpush1.msra.mxu0 0.0
  %1542 = vmatprep.subr.mxu0 0.0
  %1543 = vmatpush1.msra.mxu0 0.0
  %1544 = vmatprep.subr.mxu0 0.0
  %1545 = vmatpush1.msra.mxu0 0.0
  %1546 = vmatprep.mubr.f32.mxu0 0.0
  %1547 = vmatmul.mubr.f32.gmra.mrb[0].mxu0 %v1450
  %v1548 = vpop.f32.mrb[0].mxu0
  %v1549 = vadd.f32 0.0, %v1548
  %v1550 = vpop.f32.mrb[0].mxu0
  %1551 = vmatprep.mubr.f32.mxu0 0.0
  %1552 = vmatmul.mubr.f32.gmra.mrb[0].mxu0 %v1452
  %v1553 = vpop.f32.mrb[0].mxu0
  %v1554 = vadd.f32 0.0, %v1553
  %v1555 = vpop.f32.mrb[0].mxu0
  %1556 = vmatprep.mubr.f32.mxu0 0.0
  %1557 = vmatmul.mubr.f32.gmra.mrb[0].mxu0 %v1454
  %v1558 = vpop.f32.mrb[0].mxu0
  %v1559 = vadd.f32 0.0, %v1558
  %v1560 = vpop.f32.mrb[0].mxu0
  %1561 = vmatprep.mubr.f32.mxu0 0.0
  %1562 = vmatmul.mubr.f32.gmra.mrb[0].mxu0 %v1456
  %v1563 = vpop.f32.mrb[0].mxu0
  %v1564 = vadd.f32 0.0, %v1563
  %v1565 = vpop.f32.mrb[0].mxu0
  %1566 = vmatprep.mubr.f32.mxu0 0.0
  %1567 = vmatmul.mubr.f32.gmra.mrb[0].mxu0 %v1458
  %v1568 = vpop.f32.mrb[0].mxu0
  %v1569 = vadd.f32 0.0, %v1568
  %v1570 = vpop.f32.mrb[0].mxu0
  %1571 = vmatprep.mubr.f32.mxu0 0.0
  %1572 = vmatmul.mubr.f32.gmra.mrb[0].mxu0 %v1460
  %v1573 = vpop.f32.mrb[0].mxu0
  %v1574 = vadd.f32 0.0, %v1573
  %v1575 = vpop.f32.mrb[0].mxu0
  %1576 = vmatprep.mubr.f32.mxu0 0.0
  %1577 = vmatmul.mubr.f32.gmra.mrb[0].mxu0 %v1462
  %v1578 = vpop.f32.mrb[0].mxu0
  %v1579 = vadd.f32 0.0, %v1578
  %v1580 = vpop.f32.mrb[0].mxu0
  %1581 = vmatprep.mubr.f32.mxu0 0.0
  %1582 = vmatmul.mubr.f32.gmra.mrb[0].mxu0 %v1464
  %v1583 = vpop.f32.mrb[0].mxu0
  %v1584 = vadd.f32 0.0, %v1583
  %v1585 = vpop.f32.mrb[0].mxu0
  %1586 = vmatprep.mubr.f32.mxu0 0.0
  %1587 = vmatmul.mubr.f32.gmra.mrb[0].mxu0 %v1466
  %v1588 = vpop.f32.mrb[0].mxu0
  %v1589 = vadd.f32 0.0, %v1588
  %v1590 = vpop.f32.mrb[0].mxu0
  %1591 = vmatprep.mubr.f32.mxu0 0.0
  %1592 = vmatmul.mubr.f32.gmra.mrb[0].mxu0 %v1468
  %v1593 = vpop.f32.mrb[0].mxu0
  %v1594 = vadd.f32 0.0, %v1593
  %v1595 = vpop.f32.mrb[0].mxu0
  %1596 = vmatprep.mubr.f32.mxu0 0.0
  %1597 = vmatmul.mubr.f32.gmra.mrb[0].mxu0 %v1470
  %v1598 = vpop.f32.mrb[0].mxu0
  %v1599 = vadd.f32 0.0, %v1598
  %v1600 = vpop.f32.mrb[0].mxu0
  %1601 = vmatprep.mubr.f32.mxu0 0.0
  %1602 = vmatmul.mubr.f32.gmra.mrb[0].mxu0 %v1472
  %v1603 = vpop.f32.mrb[0].mxu0
  %v1604 = vadd.f32 0.0, %v1603
  %v1605 = vpop.f32.mrb[0].mxu0
  %1606 = vmatprep.mubr.f32.mxu0 0.0
  %1607 = vmatmul.mubr.f32.gmra.mrb[0].mxu0 %v1474
  %v1608 = vpop.f32.mrb[0].mxu0
  %v1609 = vadd.f32 0.0, %v1608
  %v1610 = vpop.f32.mrb[0].mxu0
  %1611 = vmatprep.mubr.f32.mxu0 0.0
  %1612 = vmatmul.mubr.f32.gmra.mrb[0].mxu0 %v1476
  %v1613 = vpop.f32.mrb[0].mxu0
  %v1614 = vadd.f32 0.0, %v1613
  %v1615 = vpop.f32.mrb[0].mxu0
  %1616 = vmatprep.mubr.f32.mxu0 0.0
  %1617 = vmatmul.mubr.f32.gmra.mrb[0].mxu0 %v1478
  %v1618 = vpop.f32.mrb[0].mxu0
  %v1619 = vadd.f32 0.0, %v1618
  %v1620 = vpop.f32.mrb[0].mxu0
  %1621 = vmatprep.mubr.f32.mxu0 0.0
  %1622 = vmatmul.mubr.f32.gmra.mrb[0].mxu0 %v1480
  %v1623 = vpop.f32.mrb[0].mxu0
  %v1624 = vadd.f32 0.0, %v1623
  %v1625 = vpop.f32.mrb[0].mxu0
  %1626 = vdwg.mxu0
  %v1643 = vcombine.high %v1549, %v1549
  %v1644 = vcombine.high %v1554, %v1554
  %v1645 = vcombine.high %v1559, %v1559
  %v1646 = vcombine.high %v1564, %v1564
  %v1647 = vcombine.high %v1569, %v1569
  %v1648 = vcombine.high %v1574, %v1574
  %v1649 = vcombine.high %v1579, %v1579
  %v1650 = vcombine.high %v1584, %v1584
  %v1651 = vcombine.high %v1589, %v1589
  %v1652 = vcombine.high %v1594, %v1594
  %v1653 = vcombine.high %v1599, %v1599
  %v1654 = vcombine.high %v1604, %v1604
  %v1655 = vcombine.high %v1609, %v1609
  %v1656 = vcombine.high %v1614, %v1614
  %v1657 = vcombine.high %v1619, %v1619
  %v1658 = vcombine.high %v1624, %v1624
  %1675 = vxpose.xlu0.b32.start [1/16] %v1549, 128
  %1676 = vxpose.xlu0.b32.cont [2/16] 0.0, 128
  %1677 = vxpose.xlu0.b32.cont [3/16] 0.0, 128
  %1678 = vxpose.xlu0.b32.cont [4/16] 0.0, 128
  %1679 = vxpose.xlu0.b32.cont [5/16] 0.0, 128
  %1680 = vxpose.xlu0.b32.cont [6/16] 0.0, 128
  %1681 = vxpose.xlu0.b32.cont [7/16] 0.0, 128
  %1682 = vxpose.xlu0.b32.cont [8/16] 0.0, 128
  %1683 = vxpose.xlu0.b32.cont [9/16] 0.0, 128
  %1684 = vxpose.xlu0.b32.cont [10/16] 0.0, 128
  %1685 = vxpose.xlu0.b32.cont [11/16] 0.0, 128
  %1686 = vxpose.xlu0.b32.cont [12/16] 0.0, 128
  %1687 = vxpose.xlu0.b32.cont [13/16] 0.0, 128
  %1688 = vxpose.xlu0.b32.cont [14/16] 0.0, 128
  %1689 = vxpose.xlu0.b32.cont [15/16] 0.0, 128
  %1690 = vxpose.xlu0.b32.end [16/16] 0.0, 128
  %v1691 = vpop.trf.xlu0
  %v1692 = vpop.trf.xlu0
  %v1693 = vpop.trf.xlu0
  %v1694 = vpop.trf.xlu0
  %v1695 = vpop.trf.xlu0
  %v1696 = vpop.trf.xlu0
  %v1697 = vpop.trf.xlu0
  %v1698 = vpop.trf.xlu0
  %v1699 = vpop.trf.xlu0
  %v1700 = vpop.trf.xlu0
  %v1701 = vpop.trf.xlu0
  %v1702 = vpop.trf.xlu0
  %v1703 = vpop.trf.xlu0
  %v1704 = vpop.trf.xlu0
  %v1705 = vpop.trf.xlu0
  %v1706 = vpop.trf.xlu0
  %1707 = vxpose.xlu0.b32.start [1/16] %v1643, 128
  %1708 = vxpose.xlu0.b32.cont [2/16] 0.0, 128
  %1709 = vxpose.xlu0.b32.cont [3/16] 0.0, 128
  %1710 = vxpose.xlu0.b32.cont [4/16] 0.0, 128
  %1711 = vxpose.xlu0.b32.cont [5/16] 0.0, 128
  %1712 = vxpose.xlu0.b32.cont [6/16] 0.0, 128
  %1713 = vxpose.xlu0.b32.cont [7/16] 0.0, 128
  %1714 = vxpose.xlu0.b32.cont [8/16] 0.0, 128
  %1715 = vxpose.xlu0.b32.cont [9/16] 0.0, 128
  %1716 = vxpose.xlu0.b32.cont [10/16] 0.0, 128
  %1717 = vxpose.xlu0.b32.cont [11/16] 0.0, 128
  %1718 = vxpose.xlu0.b32.cont [12/16] 0.0, 128
  %1719 = vxpose.xlu0.b32.cont [13/16] 0.0, 128
  %1720 = vxpose.xlu0.b32.cont [14/16] 0.0, 128
  %1721 = vxpose.xlu0.b32.cont [15/16] 0.0, 128
  %1722 = vxpose.xlu0.b32.end [16/16] 0.0, 128
  %v1723 = vpop.trf.xlu0
  %v1724 = vpop.trf.xlu0
  %v1725 = vpop.trf.xlu0
  %v1726 = vpop.trf.xlu0
  %v1727 = vpop.trf.xlu0
  %v1728 = vpop.trf.xlu0
  %v1729 = vpop.trf.xlu0
  %v1730 = vpop.trf.xlu0
  %v1731 = vpop.trf.xlu0
  %v1732 = vpop.trf.xlu0
  %v1733 = vpop.trf.xlu0
  %v1734 = vpop.trf.xlu0
  %v1735 = vpop.trf.xlu0
  %v1736 = vpop.trf.xlu0
  %v1737 = vpop.trf.xlu0
  %v1738 = vpop.trf.xlu0
  %1739 = vxpose.xlu0.b32.start [1/16] %v1554, 128
  %1740 = vxpose.xlu0.b32.cont [2/16] 0.0, 128
  %1741 = vxpose.xlu0.b32.cont [3/16] 0.0, 128
  %1742 = vxpose.xlu0.b32.cont [4/16] 0.0, 128
  %1743 = vxpose.xlu0.b32.cont [5/16] 0.0, 128
  %1744 = vxpose.xlu0.b32.cont [6/16] 0.0, 128
  %1745 = vxpose.xlu0.b32.cont [7/16] 0.0, 128
  %1746 = vxpose.xlu0.b32.cont [8/16] 0.0, 128
  %1747 = vxpose.xlu0.b32.cont [9/16] 0.0, 128
  %1748 = vxpose.xlu0.b32.cont [10/16] 0.0, 128
  %1749 = vxpose.xlu0.b32.cont [11/16] 0.0, 128
  %1750 = vxpose.xlu0.b32.cont [12/16] 0.0, 128
  %1751 = vxpose.xlu0.b32.cont [13/16] 0.0, 128
  %1752 = vxpose.xlu0.b32.cont [14/16] 0.0, 128
  %1753 = vxpose.xlu0.b32.cont [15/16] 0.0, 128
  %1754 = vxpose.xlu0.b32.end [16/16] 0.0, 128
  %v1755 = vpop.trf.xlu0
  %v1756 = vpop.trf.xlu0
  %v1757 = vpop.trf.xlu0
  %v1758 = vpop.trf.xlu0
  %v1759 = vpop.trf.xlu0
  %v1760 = vpop.trf.xlu0
  %v1761 = vpop.trf.xlu0
  %v1762 = vpop.trf.xlu0
  %v1763 = vpop.trf.xlu0
  %v1764 = vpop.trf.xlu0
  %v1765 = vpop.trf.xlu0
  %v1766 = vpop.trf.xlu0
  %v1767 = vpop.trf.xlu0
  %v1768 = vpop.trf.xlu0
  %v1769 = vpop.trf.xlu0
  %v1770 = vpop.trf.xlu0
  %1771 = vxpose.xlu0.b32.start [1/16] %v1644, 128
  %1772 = vxpose.xlu0.b32.cont [2/16] 0.0, 128
  %1773 = vxpose.xlu0.b32.cont [3/16] 0.0, 128
  %1774 = vxpose.xlu0.b32.cont [4/16] 0.0, 128
  %1775 = vxpose.xlu0.b32.cont [5/16] 0.0, 128
  %1776 = vxpose.xlu0.b32.cont [6/16] 0.0, 128
  %1777 = vxpose.xlu0.b32.cont [7/16] 0.0, 128
  %1778 = vxpose.xlu0.b32.cont [8/16] 0.0, 128
  %1779 = vxpose.xlu0.b32.cont [9/16] 0.0, 128
  %1780 = vxpose.xlu0.b32.cont [10/16] 0.0, 128
  %1781 = vxpose.xlu0.b32.cont [11/16] 0.0, 128
  %1782 = vxpose.xlu0.b32.cont [12/16] 0.0, 128
  %1783 = vxpose.xlu0.b32.cont [13/16] 0.0, 128
  %1784 = vxpose.xlu0.b32.cont [14/16] 0.0, 128
  %1785 = vxpose.xlu0.b32.cont [15/16] 0.0, 128
  %1786 = vxpose.xlu0.b32.end [16/16] 0.0, 128
  %v1787 = vpop.trf.xlu0
  %v1788 = vpop.trf.xlu0
  %v1789 = vpop.trf.xlu0
  %v1790 = vpop.trf.xlu0
  %v1791 = vpop.trf.xlu0
  %v1792 = vpop.trf.xlu0
  %v1793 = vpop.trf.xlu0
  %v1794 = vpop.trf.xlu0
  %v1795 = vpop.trf.xlu0
  %v1796 = vpop.trf.xlu0
  %v1797 = vpop.trf.xlu0
  %v1798 = vpop.trf.xlu0
  %v1799 = vpop.trf.xlu0
  %v1800 = vpop.trf.xlu0
  %v1801 = vpop.trf.xlu0
  %v1802 = vpop.trf.xlu0
  %1803 = vxpose.xlu0.b32.start [1/16] %v1559, 128
  %1804 = vxpose.xlu0.b32.cont [2/16] 0.0, 128
  %1805 = vxpose.xlu0.b32.cont [3/16] 0.0, 128
  %1806 = vxpose.xlu0.b32.cont [4/16] 0.0, 128
  %1807 = vxpose.xlu0.b32.cont [5/16] 0.0, 128
  %1808 = vxpose.xlu0.b32.cont [6/16] 0.0, 128
  %1809 = vxpose.xlu0.b32.cont [7/16] 0.0, 128
  %1810 = vxpose.xlu0.b32.cont [8/16] 0.0, 128
  %1811 = vxpose.xlu0.b32.cont [9/16] 0.0, 128
  %1812 = vxpose.xlu0.b32.cont [10/16] 0.0, 128
  %1813 = vxpose.xlu0.b32.cont [11/16] 0.0, 128
  %1814 = vxpose.xlu0.b32.cont [12/16] 0.0, 128
  %1815 = vxpose.xlu0.b32.cont [13/16] 0.0, 128
  %1816 = vxpose.xlu0.b32.cont [14/16] 0.0, 128
  %1817 = vxpose.xlu0.b32.cont [15/16] 0.0, 128
  %1818 = vxpose.xlu0.b32.end [16/16] 0.0, 128
  %v1819 = vpop.trf.xlu0
  %v1820 = vpop.trf.xlu0
  %v1821 = vpop.trf.xlu0
  %v1822 = vpop.trf.xlu0
  %v1823 = vpop.trf.xlu0
  %v1824 = vpop.trf.xlu0
  %v1825 = vpop.trf.xlu0
  %v1826 = vpop.trf.xlu0
  %v1827 = vpop.trf.xlu0
  %v1828 = vpop.trf.xlu0
  %v1829 = vpop.trf.xlu0
  %v1830 = vpop.trf.xlu0
  %v1831 = vpop.trf.xlu0
  %v1832 = vpop.trf.xlu0
  %v1833 = vpop.trf.xlu0
  %v1834 = vpop.trf.xlu0
  %1835 = vxpose.xlu0.b32.start [1/16] %v1645, 128
  %1836 = vxpose.xlu0.b32.cont [2/16] 0.0, 128
  %1837 = vxpose.xlu0.b32.cont [3/16] 0.0, 128
  %1838 = vxpose.xlu0.b32.cont [4/16] 0.0, 128
  %1839 = vxpose.xlu0.b32.cont [5/16] 0.0, 128
  %1840 = vxpose.xlu0.b32.cont [6/16] 0.0, 128
  %1841 = vxpose.xlu0.b32.cont [7/16] 0.0, 128
  %1842 = vxpose.xlu0.b32.cont [8/16] 0.0, 128
  %1843 = vxpose.xlu0.b32.cont [9/16] 0.0, 128
  %1844 = vxpose.xlu0.b32.cont [10/16] 0.0, 128
  %1845 = vxpose.xlu0.b32.cont [11/16] 0.0, 128
  %1846 = vxpose.xlu0.b32.cont [12/16] 0.0, 128
  %1847 = vxpose.xlu0.b32.cont [13/16] 0.0, 128
  %1848 = vxpose.xlu0.b32.cont [14/16] 0.0, 128
  %1849 = vxpose.xlu0.b32.cont [15/16] 0.0, 128
  %1850 = vxpose.xlu0.b32.end [16/16] 0.0, 128
  %v1851 = vpop.trf.xlu0
  %v1852 = vpop.trf.xlu0
  %v1853 = vpop.trf.xlu0
  %v1854 = vpop.trf.xlu0
  %v1855 = vpop.trf.xlu0
  %v1856 = vpop.trf.xlu0
  %v1857 = vpop.trf.xlu0
  %v1858 = vpop.trf.xlu0
  %v1859 = vpop.trf.xlu0
  %v1860 = vpop.trf.xlu0
  %v1861 = vpop.trf.xlu0
  %v1862 = vpop.trf.xlu0
  %v1863 = vpop.trf.xlu0
  %v1864 = vpop.trf.xlu0
  %v1865 = vpop.trf.xlu0
  %v1866 = vpop.trf.xlu0
  %1867 = vxpose.xlu0.b32.start [1/16] %v1564, 128
  %1868 = vxpose.xlu0.b32.cont [2/16] 0.0, 128
  %1869 = vxpose.xlu0.b32.cont [3/16] 0.0, 128
  %1870 = vxpose.xlu0.b32.cont [4/16] 0.0, 128
  %1871 = vxpose.xlu0.b32.cont [5/16] 0.0, 128
  %1872 = vxpose.xlu0.b32.cont [6/16] 0.0, 128
  %1873 = vxpose.xlu0.b32.cont [7/16] 0.0, 128
  %1874 = vxpose.xlu0.b32.cont [8/16] 0.0, 128
  %1875 = vxpose.xlu0.b32.cont [9/16] 0.0, 128
  %1876 = vxpose.xlu0.b32.cont [10/16] 0.0, 128
  %1877 = vxpose.xlu0.b32.cont [11/16] 0.0, 128
  %1878 = vxpose.xlu0.b32.cont [12/16] 0.0, 128
  %1879 = vxpose.xlu0.b32.cont [13/16] 0.0, 128
  %1880 = vxpose.xlu0.b32.cont [14/16] 0.0, 128
  %1881 = vxpose.xlu0.b32.cont [15/16] 0.0, 128
  %1882 = vxpose.xlu0.b32.end [16/16] 0.0, 128
  %v1883 = vpop.trf.xlu0
  %v1884 = vpop.trf.xlu0
  %v1885 = vpop.trf.xlu0
  %v1886 = vpop.trf.xlu0
  %v1887 = vpop.trf.xlu0
  %v1888 = vpop.trf.xlu0
  %v1889 = vpop.trf.xlu0
  %v1890 = vpop.trf.xlu0
  %v1891 = vpop.trf.xlu0
  %v1892 = vpop.trf.xlu0
  %v1893 = vpop.trf.xlu0
  %v1894 = vpop.trf.xlu0
  %v1895 = vpop.trf.xlu0
  %v1896 = vpop.trf.xlu0
  %v1897 = vpop.trf.xlu0
  %v1898 = vpop.trf.xlu0
  %1899 = vxpose.xlu0.b32.start [1/16] %v1646, 128
  %1900 = vxpose.xlu0.b32.cont [2/16] 0.0, 128
  %1901 = vxpose.xlu0.b32.cont [3/16] 0.0, 128
  %1902 = vxpose.xlu0.b32.cont [4/16] 0.0, 128
  %1903 = vxpose.xlu0.b32.cont [5/16] 0.0, 128
  %1904 = vxpose.xlu0.b32.cont [6/16] 0.0, 128
  %1905 = vxpose.xlu0.b32.cont [7/16] 0.0, 128
  %1906 = vxpose.xlu0.b32.cont [8/16] 0.0, 128
  %1907 = vxpose.xlu0.b32.cont [9/16] 0.0, 128
  %1908 = vxpose.xlu0.b32.cont [10/16] 0.0, 128
  %1909 = vxpose.xlu0.b32.cont [11/16] 0.0, 128
  %1910 = vxpose.xlu0.b32.cont [12/16] 0.0, 128
  %1911 = vxpose.xlu0.b32.cont [13/16] 0.0, 128
  %1912 = vxpose.xlu0.b32.cont [14/16] 0.0, 128
  %1913 = vxpose.xlu0.b32.cont [15/16] 0.0, 128
  %1914 = vxpose.xlu0.b32.end [16/16] 0.0, 128
  %v1915 = vpop.trf.xlu0
  %v1916 = vpop.trf.xlu0
  %v1917 = vpop.trf.xlu0
  %v1918 = vpop.trf.xlu0
  %v1919 = vpop.trf.xlu0
  %v1920 = vpop.trf.xlu0
  %v1921 = vpop.trf.xlu0
  %v1922 = vpop.trf.xlu0
  %v1923 = vpop.trf.xlu0
  %v1924 = vpop.trf.xlu0
  %v1925 = vpop.trf.xlu0
  %v1926 = vpop.trf.xlu0
  %v1927 = vpop.trf.xlu0
  %v1928 = vpop.trf.xlu0
  %v1929 = vpop.trf.xlu0
  %v1930 = vpop.trf.xlu0
  %1931 = vxpose.xlu0.b32.start [1/16] %v1569, 128
  %1932 = vxpose.xlu0.b32.cont [2/16] 0.0, 128
  %1933 = vxpose.xlu0.b32.cont [3/16] 0.0, 128
  %1934 = vxpose.xlu0.b32.cont [4/16] 0.0, 128
  %1935 = vxpose.xlu0.b32.cont [5/16] 0.0, 128
  %1936 = vxpose.xlu0.b32.cont [6/16] 0.0, 128
  %1937 = vxpose.xlu0.b32.cont [7/16] 0.0, 128
  %1938 = vxpose.xlu0.b32.cont [8/16] 0.0, 128
  %1939 = vxpose.xlu0.b32.cont [9/16] 0.0, 128
  %1940 = vxpose.xlu0.b32.cont [10/16] 0.0, 128
  %1941 = vxpose.xlu0.b32.cont [11/16] 0.0, 128
  %1942 = vxpose.xlu0.b32.cont [12/16] 0.0, 128
  %1943 = vxpose.xlu0.b32.cont [13/16] 0.0, 128
  %1944 = vxpose.xlu0.b32.cont [14/16] 0.0, 128
  %1945 = vxpose.xlu0.b32.cont [15/16] 0.0, 128
  %1946 = vxpose.xlu0.b32.end [16/16] 0.0, 128
  %v1947 = vpop.trf.xlu0
  %v1948 = vpop.trf.xlu0
  %v1949 = vpop.trf.xlu0
  %v1950 = vpop.trf.xlu0
  %v1951 = vpop.trf.xlu0
  %v1952 = vpop.trf.xlu0
  %v1953 = vpop.trf.xlu0
  %v1954 = vpop.trf.xlu0
  %v1955 = vpop.trf.xlu0
  %v1956 = vpop.trf.xlu0
  %v1957 = vpop.trf.xlu0
  %v1958 = vpop.trf.xlu0
  %v1959 = vpop.trf.xlu0
  %v1960 = vpop.trf.xlu0
  %v1961 = vpop.trf.xlu0
  %v1962 = vpop.trf.xlu0
  %1963 = vxpose.xlu0.b32.start [1/16] %v1647, 128
  %1964 = vxpose.xlu0.b32.cont [2/16] 0.0, 128
  %1965 = vxpose.xlu0.b32.cont [3/16] 0.0, 128
  %1966 = vxpose.xlu0.b32.cont [4/16] 0.0, 128
  %1967 = vxpose.xlu0.b32.cont [5/16] 0.0, 128
  %1968 = vxpose.xlu0.b32.cont [6/16] 0.0, 128
  %1969 = vxpose.xlu0.b32.cont [7/16] 0.0, 128
  %1970 = vxpose.xlu0.b32.cont [8/16] 0.0, 128
  %1971 = vxpose.xlu0.b32.cont [9/16] 0.0, 128
  %1972 = vxpose.xlu0.b32.cont [10/16] 0.0, 128
  %1973 = vxpose.xlu0.b32.cont [11/16] 0.0, 128
  %1974 = vxpose.xlu0.b32.cont [12/16] 0.0, 128
  %1975 = vxpose.xlu0.b32.cont [13/16] 0.0, 128
  %1976 = vxpose.xlu0.b32.cont [14/16] 0.0, 128
  %1977 = vxpose.xlu0.b32.cont [15/16] 0.0, 128
  %1978 = vxpose.xlu0.b32.end [16/16] 0.0, 128
  %v1979 = vpop.trf.xlu0
  %v1980 = vpop.trf.xlu0
  %v1981 = vpop.trf.xlu0
  %v1982 = vpop.trf.xlu0
  %v1983 = vpop.trf.xlu0
  %v1984 = vpop.trf.xlu0
  %v1985 = vpop.trf.xlu0
  %v1986 = vpop.trf.xlu0
  %v1987 = vpop.trf.xlu0
  %v1988 = vpop.trf.xlu0
  %v1989 = vpop.trf.xlu0
  %v1990 = vpop.trf.xlu0
  %v1991 = vpop.trf.xlu0
  %v1992 = vpop.trf.xlu0
  %v1993 = vpop.trf.xlu0
  %v1994 = vpop.trf.xlu0
  %1995 = vxpose.xlu0.b32.start [1/16] %v1574, 128
  %1996 = vxpose.xlu0.b32.cont [2/16] 0.0, 128
  %1997 = vxpose.xlu0.b32.cont [3/16] 0.0, 128
  %1998 = vxpose.xlu0.b32.cont [4/16] 0.0, 128
  %1999 = vxpose.xlu0.b32.cont [5/16] 0.0, 128
  %2000 = vxpose.xlu0.b32.cont [6/16] 0.0, 128
  %2001 = vxpose.xlu0.b32.cont [7/16] 0.0, 128
  %2002 = vxpose.xlu0.b32.cont [8/16] 0.0, 128
  %2003 = vxpose.xlu0.b32.cont [9/16] 0.0, 128
  %2004 = vxpose.xlu0.b32.cont [10/16] 0.0, 128
  %2005 = vxpose.xlu0.b32.cont [11/16] 0.0, 128
  %2006 = vxpose.xlu0.b32.cont [12/16] 0.0, 128
  %2007 = vxpose.xlu0.b32.cont [13/16] 0.0, 128
  %2008 = vxpose.xlu0.b32.cont [14/16] 0.0, 128
  %2009 = vxpose.xlu0.b32.cont [15/16] 0.0, 128
  %2010 = vxpose.xlu0.b32.end [16/16] 0.0, 128
  %v2011 = vpop.trf.xlu0
  %v2012 = vpop.trf.xlu0
  %v2013 = vpop.trf.xlu0
  %v2014 = vpop.trf.xlu0
  %v2015 = vpop.trf.xlu0
  %v2016 = vpop.trf.xlu0
  %v2017 = vpop.trf.xlu0
  %v2018 = vpop.trf.xlu0
  %v2019 = vpop.trf.xlu0
  %v2020 = vpop.trf.xlu0
  %v2021 = vpop.trf.xlu0
  %v2022 = vpop.trf.xlu0
  %v2023 = vpop.trf.xlu0
  %v2024 = vpop.trf.xlu0
  %v2025 = vpop.trf.xlu0
  %v2026 = vpop.trf.xlu0
  %2027 = vxpose.xlu0.b32.start [1/16] %v1648, 128
  %2028 = vxpose.xlu0.b32.cont [2/16] 0.0, 128
  %2029 = vxpose.xlu0.b32.cont [3/16] 0.0, 128
  %2030 = vxpose.xlu0.b32.cont [4/16] 0.0, 128
  %2031 = vxpose.xlu0.b32.cont [5/16] 0.0, 128
  %2032 = vxpose.xlu0.b32.cont [6/16] 0.0, 128
  %2033 = vxpose.xlu0.b32.cont [7/16] 0.0, 128
  %2034 = vxpose.xlu0.b32.cont [8/16] 0.0, 128
  %2035 = vxpose.xlu0.b32.cont [9/16] 0.0, 128
  %2036 = vxpose.xlu0.b32.cont [10/16] 0.0, 128
  %2037 = vxpose.xlu0.b32.cont [11/16] 0.0, 128
  %2038 = vxpose.xlu0.b32.cont [12/16] 0.0, 128
  %2039 = vxpose.xlu0.b32.cont [13/16] 0.0, 128
  %2040 = vxpose.xlu0.b32.cont [14/16] 0.0, 128
  %2041 = vxpose.xlu0.b32.cont [15/16] 0.0, 128
  %2042 = vxpose.xlu0.b32.end [16/16] 0.0, 128
  %v2043 = vpop.trf.xlu0
  %v2044 = vpop.trf.xlu0
  %v2045 = vpop.trf.xlu0
  %v2046 = vpop.trf.xlu0
  %v2047 = vpop.trf.xlu0
  %v2048 = vpop.trf.xlu0
  %v2049 = vpop.trf.xlu0
  %v2050 = vpop.trf.xlu0
  %v2051 = vpop.trf.xlu0
  %v2052 = vpop.trf.xlu0
  %v2053 = vpop.trf.xlu0
  %v2054 = vpop.trf.xlu0
  %v2055 = vpop.trf.xlu0
  %v2056 = vpop.trf.xlu0
  %v2057 = vpop.trf.xlu0
  %v2058 = vpop.trf.xlu0
  %2059 = vxpose.xlu0.b32.start [1/16] %v1579, 128
  %2060 = vxpose.xlu0.b32.cont [2/16] 0.0, 128
  %2061 = vxpose.xlu0.b32.cont [3/16] 0.0, 128
  %2062 = vxpose.xlu0.b32.cont [4/16] 0.0, 128
  %2063 = vxpose.xlu0.b32.cont [5/16] 0.0, 128
  %2064 = vxpose.xlu0.b32.cont [6/16] 0.0, 128
  %2065 = vxpose.xlu0.b32.cont [7/16] 0.0, 128
  %2066 = vxpose.xlu0.b32.cont [8/16] 0.0, 128
  %2067 = vxpose.xlu0.b32.cont [9/16] 0.0, 128
  %2068 = vxpose.xlu0.b32.cont [10/16] 0.0, 128
  %2069 = vxpose.xlu0.b32.cont [11/16] 0.0, 128
  %2070 = vxpose.xlu0.b32.cont [12/16] 0.0, 128
  %2071 = vxpose.xlu0.b32.cont [13/16] 0.0, 128
  %2072 = vxpose.xlu0.b32.cont [14/16] 0.0, 128
  %2073 = vxpose.xlu0.b32.cont [15/16] 0.0, 128
  %2074 = vxpose.xlu0.b32.end [16/16] 0.0, 128
  %v2075 = vpop.trf.xlu0
  %v2076 = vpop.trf.xlu0
  %v2077 = vpop.trf.xlu0
  %v2078 = vpop.trf.xlu0
  %v2079 = vpop.trf.xlu0
  %v2080 = vpop.trf.xlu0
  %v2081 = vpop.trf.xlu0
  %v2082 = vpop.trf.xlu0
  %v2083 = vpop.trf.xlu0
  %v2084 = vpop.trf.xlu0
  %v2085 = vpop.trf.xlu0
  %v2086 = vpop.trf.xlu0
  %v2087 = vpop.trf.xlu0
  %v2088 = vpop.trf.xlu0
  %v2089 = vpop.trf.xlu0
  %v2090 = vpop.trf.xlu0
  %2091 = vxpose.xlu0.b32.start [1/16] %v1649, 128
  %2092 = vxpose.xlu0.b32.cont [2/16] 0.0, 128
  %2093 = vxpose.xlu0.b32.cont [3/16] 0.0, 128
  %2094 = vxpose.xlu0.b32.cont [4/16] 0.0, 128
  %2095 = vxpose.xlu0.b32.cont [5/16] 0.0, 128
  %2096 = vxpose.xlu0.b32.cont [6/16] 0.0, 128
  %2097 = vxpose.xlu0.b32.cont [7/16] 0.0, 128
  %2098 = vxpose.xlu0.b32.cont [8/16] 0.0, 128
  %2099 = vxpose.xlu0.b32.cont [9/16] 0.0, 128
  %2100 = vxpose.xlu0.b32.cont [10/16] 0.0, 128
  %2101 = vxpose.xlu0.b32.cont [11/16] 0.0, 128
  %2102 = vxpose.xlu0.b32.cont [12/16] 0.0, 128
  %2103 = vxpose.xlu0.b32.cont [13/16] 0.0, 128
  %2104 = vxpose.xlu0.b32.cont [14/16] 0.0, 128
  %2105 = vxpose.xlu0.b32.cont [15/16] 0.0, 128
  %2106 = vxpose.xlu0.b32.end [16/16] 0.0, 128
  %v2107 = vpop.trf.xlu0
  %v2108 = vpop.trf.xlu0
  %v2109 = vpop.trf.xlu0
  %v2110 = vpop.trf.xlu0
  %v2111 = vpop.trf.xlu0
  %v2112 = vpop.trf.xlu0
  %v2113 = vpop.trf.xlu0
  %v2114 = vpop.trf.xlu0
  %v2115 = vpop.trf.xlu0
  %v2116 = vpop.trf.xlu0
  %v2117 = vpop.trf.xlu0
  %v2118 = vpop.trf.xlu0
  %v2119 = vpop.trf.xlu0
  %v2120 = vpop.trf.xlu0
  %v2121 = vpop.trf.xlu0
  %v2122 = vpop.trf.xlu0
  %2123 = vxpose.xlu0.b32.start [1/16] %v1584, 128
  %2124 = vxpose.xlu0.b32.cont [2/16] 0.0, 128
  %2125 = vxpose.xlu0.b32.cont [3/16] 0.0, 128
  %2126 = vxpose.xlu0.b32.cont [4/16] 0.0, 128
  %2127 = vxpose.xlu0.b32.cont [5/16] 0.0, 128
  %2128 = vxpose.xlu0.b32.cont [6/16] 0.0, 128
  %2129 = vxpose.xlu0.b32.cont [7/16] 0.0, 128
  %2130 = vxpose.xlu0.b32.cont [8/16] 0.0, 128
  %2131 = vxpose.xlu0.b32.cont [9/16] 0.0, 128
  %2132 = vxpose.xlu0.b32.cont [10/16] 0.0, 128
  %2133 = vxpose.xlu0.b32.cont [11/16] 0.0, 128
  %2134 = vxpose.xlu0.b32.cont [12/16] 0.0, 128
  %2135 = vxpose.xlu0.b32.cont [13/16] 0.0, 128
  %2136 = vxpose.xlu0.b32.cont [14/16] 0.0, 128
  %2137 = vxpose.xlu0.b32.cont [15/16] 0.0, 128
  %2138 = vxpose.xlu0.b32.end [16/16] 0.0, 128
  %v2139 = vpop.trf.xlu0
  %v2140 = vpop.trf.xlu0
  %v2141 = vpop.trf.xlu0
  %v2142 = vpop.trf.xlu0
  %v2143 = vpop.trf.xlu0
  %v2144 = vpop.trf.xlu0
  %v2145 = vpop.trf.xlu0
  %v2146 = vpop.trf.xlu0
  %v2147 = vpop.trf.xlu0
  %v2148 = vpop.trf.xlu0
  %v2149 = vpop.trf.xlu0
  %v2150 = vpop.trf.xlu0
  %v2151 = vpop.trf.xlu0
  %v2152 = vpop.trf.xlu0
  %v2153 = vpop.trf.xlu0
  %v2154 = vpop.trf.xlu0
  %2155 = vxpose.xlu0.b32.start [1/16] %v1650, 128
  %2156 = vxpose.xlu0.b32.cont [2/16] 0.0, 128
  %2157 = vxpose.xlu0.b32.cont [3/16] 0.0, 128
  %2158 = vxpose.xlu0.b32.cont [4/16] 0.0, 128
  %2159 = vxpose.xlu0.b32.cont [5/16] 0.0, 128
  %2160 = vxpose.xlu0.b32.cont [6/16] 0.0, 128
  %2161 = vxpose.xlu0.b32.cont [7/16] 0.0, 128
  %2162 = vxpose.xlu0.b32.cont [8/16] 0.0, 128
  %2163 = vxpose.xlu0.b32.cont [9/16] 0.0, 128
  %2164 = vxpose.xlu0.b32.cont [10/16] 0.0, 128
  %2165 = vxpose.xlu0.b32.cont [11/16] 0.0, 128
  %2166 = vxpose.xlu0.b32.cont [12/16] 0.0, 128
  %2167 = vxpose.xlu0.b32.cont [13/16] 0.0, 128
  %2168 = vxpose.xlu0.b32.cont [14/16] 0.0, 128
  %2169 = vxpose.xlu0.b32.cont [15/16] 0.0, 128
  %2170 = vxpose.xlu0.b32.end [16/16] 0.0, 128
  %v2171 = vpop.trf.xlu0
  %v2172 = vpop.trf.xlu0
  %v2173 = vpop.trf.xlu0
  %v2174 = vpop.trf.xlu0
  %v2175 = vpop.trf.xlu0
  %v2176 = vpop.trf.xlu0
  %v2177 = vpop.trf.xlu0
  %v2178 = vpop.trf.xlu0
  %v2179 = vpop.trf.xlu0
  %v2180 = vpop.trf.xlu0
  %v2181 = vpop.trf.xlu0
  %v2182 = vpop.trf.xlu0
  %v2183 = vpop.trf.xlu0
  %v2184 = vpop.trf.xlu0
  %v2185 = vpop.trf.xlu0
  %v2186 = vpop.trf.xlu0
  %2187 = vxpose.xlu0.b32.start [1/16] %v1589, 128
  %2188 = vxpose.xlu0.b32.cont [2/16] 0.0, 128
  %2189 = vxpose.xlu0.b32.cont [3/16] 0.0, 128
  %2190 = vxpose.xlu0.b32.cont [4/16] 0.0, 128
  %2191 = vxpose.xlu0.b32.cont [5/16] 0.0, 128
  %2192 = vxpose.xlu0.b32.cont [6/16] 0.0, 128
  %2193 = vxpose.xlu0.b32.cont [7/16] 0.0, 128
  %2194 = vxpose.xlu0.b32.cont [8/16] 0.0, 128
  %2195 = vxpose.xlu0.b32.cont [9/16] 0.0, 128
  %2196 = vxpose.xlu0.b32.cont [10/16] 0.0, 128
  %2197 = vxpose.xlu0.b32.cont [11/16] 0.0, 128
  %2198 = vxpose.xlu0.b32.cont [12/16] 0.0, 128
  %2199 = vxpose.xlu0.b32.cont [13/16] 0.0, 128
  %2200 = vxpose.xlu0.b32.cont [14/16] 0.0, 128
  %2201 = vxpose.xlu0.b32.cont [15/16] 0.0, 128
  %2202 = vxpose.xlu0.b32.end [16/16] 0.0, 128
  %v2203 = vpop.trf.xlu0
  %v2204 = vpop.trf.xlu0
  %v2205 = vpop.trf.xlu0
  %v2206 = vpop.trf.xlu0
  %v2207 = vpop.trf.xlu0
  %v2208 = vpop.trf.xlu0
  %v2209 = vpop.trf.xlu0
  %v2210 = vpop.trf.xlu0
  %v2211 = vpop.trf.xlu0
  %v2212 = vpop.trf.xlu0
  %v2213 = vpop.trf.xlu0
  %v2214 = vpop.trf.xlu0
  %v2215 = vpop.trf.xlu0
  %v2216 = vpop.trf.xlu0
  %v2217 = vpop.trf.xlu0
  %v2218 = vpop.trf.xlu0
  %2219 = vxpose.xlu0.b32.start [1/16] %v1651, 128
  %2220 = vxpose.xlu0.b32.cont [2/16] 0.0, 128
  %2221 = vxpose.xlu0.b32.cont [3/16] 0.0, 128
  %2222 = vxpose.xlu0.b32.cont [4/16] 0.0, 128
  %2223 = vxpose.xlu0.b32.cont [5/16] 0.0, 128
  %2224 = vxpose.xlu0.b32.cont [6/16] 0.0, 128
  %2225 = vxpose.xlu0.b32.cont [7/16] 0.0, 128
  %2226 = vxpose.xlu0.b32.cont [8/16] 0.0, 128
  %2227 = vxpose.xlu0.b32.cont [9/16] 0.0, 128
  %2228 = vxpose.xlu0.b32.cont [10/16] 0.0, 128
  %2229 = vxpose.xlu0.b32.cont [11/16] 0.0, 128
  %2230 = vxpose.xlu0.b32.cont [12/16] 0.0, 128
  %2231 = vxpose.xlu0.b32.cont [13/16] 0.0, 128
  %2232 = vxpose.xlu0.b32.cont [14/16] 0.0, 128
  %2233 = vxpose.xlu0.b32.cont [15/16] 0.0, 128
  %2234 = vxpose.xlu0.b32.end [16/16] 0.0, 128
  %v2235 = vpop.trf.xlu0
  %v2236 = vpop.trf.xlu0
  %v2237 = vpop.trf.xlu0
  %v2238 = vpop.trf.xlu0
  %v2239 = vpop.trf.xlu0
  %v2240 = vpop.trf.xlu0
  %v2241 = vpop.trf.xlu0
  %v2242 = vpop.trf.xlu0
  %v2243 = vpop.trf.xlu0
  %v2244 = vpop.trf.xlu0
  %v2245 = vpop.trf.xlu0
  %v2246 = vpop.trf.xlu0
  %v2247 = vpop.trf.xlu0
  %v2248 = vpop.trf.xlu0
  %v2249 = vpop.trf.xlu0
  %v2250 = vpop.trf.xlu0
  %2251 = vxpose.xlu0.b32.start [1/16] %v1594, 128
  %2252 = vxpose.xlu0.b32.cont [2/16] 0.0, 128
  %2253 = vxpose.xlu0.b32.cont [3/16] 0.0, 128
  %2254 = vxpose.xlu0.b32.cont [4/16] 0.0, 128
  %2255 = vxpose.xlu0.b32.cont [5/16] 0.0, 128
  %2256 = vxpose.xlu0.b32.cont [6/16] 0.0, 128
  %2257 = vxpose.xlu0.b32.cont [7/16] 0.0, 128
  %2258 = vxpose.xlu0.b32.cont [8/16] 0.0, 128
  %2259 = vxpose.xlu0.b32.cont [9/16] 0.0, 128
  %2260 = vxpose.xlu0.b32.cont [10/16] 0.0, 128
  %2261 = vxpose.xlu0.b32.cont [11/16] 0.0, 128
  %2262 = vxpose.xlu0.b32.cont [12/16] 0.0, 128
  %2263 = vxpose.xlu0.b32.cont [13/16] 0.0, 128
  %2264 = vxpose.xlu0.b32.cont [14/16] 0.0, 128
  %2265 = vxpose.xlu0.b32.cont [15/16] 0.0, 128
  %2266 = vxpose.xlu0.b32.end [16/16] 0.0, 128
  %v2267 = vpop.trf.xlu0
  %v2268 = vpop.trf.xlu0
  %v2269 = vpop.trf.xlu0
  %v2270 = vpop.trf.xlu0
  %v2271 = vpop.trf.xlu0
  %v2272 = vpop.trf.xlu0
  %v2273 = vpop.trf.xlu0
  %v2274 = vpop.trf.xlu0
  %v2275 = vpop.trf.xlu0
  %v2276 = vpop.trf.xlu0
  %v2277 = vpop.trf.xlu0
  %v2278 = vpop.trf.xlu0
  %v2279 = vpop.trf.xlu0
  %v2280 = vpop.trf.xlu0
  %v2281 = vpop.trf.xlu0
  %v2282 = vpop.trf.xlu0
  %2283 = vxpose.xlu0.b32.start [1/16] %v1652, 128
  %2284 = vxpose.xlu0.b32.cont [2/16] 0.0, 128
  %2285 = vxpose.xlu0.b32.cont [3/16] 0.0, 128
  %2286 = vxpose.xlu0.b32.cont [4/16] 0.0, 128
  %2287 = vxpose.xlu0.b32.cont [5/16] 0.0, 128
  %2288 = vxpose.xlu0.b32.cont [6/16] 0.0, 128
  %2289 = vxpose.xlu0.b32.cont [7/16] 0.0, 128
  %2290 = vxpose.xlu0.b32.cont [8/16] 0.0, 128
  %2291 = vxpose.xlu0.b32.cont [9/16] 0.0, 128
  %2292 = vxpose.xlu0.b32.cont [10/16] 0.0, 128
  %2293 = vxpose.xlu0.b32.cont [11/16] 0.0, 128
  %2294 = vxpose.xlu0.b32.cont [12/16] 0.0, 128
  %2295 = vxpose.xlu0.b32.cont [13/16] 0.0, 128
  %2296 = vxpose.xlu0.b32.cont [14/16] 0.0, 128
  %2297 = vxpose.xlu0.b32.cont [15/16] 0.0, 128
  %2298 = vxpose.xlu0.b32.end [16/16] 0.0, 128
  %v2299 = vpop.trf.xlu0
  %v2300 = vpop.trf.xlu0
  %v2301 = vpop.trf.xlu0
  %v2302 = vpop.trf.xlu0
  %v2303 = vpop.trf.xlu0
  %v2304 = vpop.trf.xlu0
  %v2305 = vpop.trf.xlu0
  %v2306 = vpop.trf.xlu0
  %v2307 = vpop.trf.xlu0
  %v2308 = vpop.trf.xlu0
  %v2309 = vpop.trf.xlu0
  %v2310 = vpop.trf.xlu0
  %v2311 = vpop.trf.xlu0
  %v2312 = vpop.trf.xlu0
  %v2313 = vpop.trf.xlu0
  %v2314 = vpop.trf.xlu0
  %2315 = vxpose.xlu0.b32.start [1/16] %v1599, 128
  %2316 = vxpose.xlu0.b32.cont [2/16] 0.0, 128
  %2317 = vxpose.xlu0.b32.cont [3/16] 0.0, 128
  %2318 = vxpose.xlu0.b32.cont [4/16] 0.0, 128
  %2319 = vxpose.xlu0.b32.cont [5/16] 0.0, 128
  %2320 = vxpose.xlu0.b32.cont [6/16] 0.0, 128
  %2321 = vxpose.xlu0.b32.cont [7/16] 0.0, 128
  %2322 = vxpose.xlu0.b32.cont [8/16] 0.0, 128
  %2323 = vxpose.xlu0.b32.cont [9/16] 0.0, 128
  %2324 = vxpose.xlu0.b32.cont [10/16] 0.0, 128
  %2325 = vxpose.xlu0.b32.cont [11/16] 0.0, 128
  %2326 = vxpose.xlu0.b32.cont [12/16] 0.0, 128
  %2327 = vxpose.xlu0.b32.cont [13/16] 0.0, 128
  %2328 = vxpose.xlu0.b32.cont [14/16] 0.0, 128
  %2329 = vxpose.xlu0.b32.cont [15/16] 0.0, 128
  %2330 = vxpose.xlu0.b32.end [16/16] 0.0, 128
  %v2331 = vpop.trf.xlu0
  %v2332 = vpop.trf.xlu0
  %v2333 = vpop.trf.xlu0
  %v2334 = vpop.trf.xlu0
  %v2335 = vpop.trf.xlu0
  %v2336 = vpop.trf.xlu0
  %v2337 = vpop.trf.xlu0
  %v2338 = vpop.trf.xlu0
  %v2339 = vpop.trf.xlu0
  %v2340 = vpop.trf.xlu0
  %v2341 = vpop.trf.xlu0
  %v2342 = vpop.trf.xlu0
  %v2343 = vpop.trf.xlu0
  %v2344 = vpop.trf.xlu0
  %v2345 = vpop.trf.xlu0
  %v2346 = vpop.trf.xlu0
  %2347 = vxpose.xlu0.b32.start [1/16] %v1653, 128
  %2348 = vxpose.xlu0.b32.cont [2/16] 0.0, 128
  %2349 = vxpose.xlu0.b32.cont [3/16] 0.0, 128
  %2350 = vxpose.xlu0.b32.cont [4/16] 0.0, 128
  %2351 = vxpose.xlu0.b32.cont [5/16] 0.0, 128
  %2352 = vxpose.xlu0.b32.cont [6/16] 0.0, 128
  %2353 = vxpose.xlu0.b32.cont [7/16] 0.0, 128
  %2354 = vxpose.xlu0.b32.cont [8/16] 0.0, 128
  %2355 = vxpose.xlu0.b32.cont [9/16] 0.0, 128
  %2356 = vxpose.xlu0.b32.cont [10/16] 0.0, 128
  %2357 = vxpose.xlu0.b32.cont [11/16] 0.0, 128
  %2358 = vxpose.xlu0.b32.cont [12/16] 0.0, 128
  %2359 = vxpose.xlu0.b32.cont [13/16] 0.0, 128
  %2360 = vxpose.xlu0.b32.cont [14/16] 0.0, 128
  %2361 = vxpose.xlu0.b32.cont [15/16] 0.0, 128
  %2362 = vxpose.xlu0.b32.end [16/16] 0.0, 128
  %v2363 = vpop.trf.xlu0
  %v2364 = vpop.trf.xlu0
  %v2365 = vpop.trf.xlu0
  %v2366 = vpop.trf.xlu0
  %v2367 = vpop.trf.xlu0
  %v2368 = vpop.trf.xlu0
  %v2369 = vpop.trf.xlu0
  %v2370 = vpop.trf.xlu0
  %v2371 = vpop.trf.xlu0
  %v2372 = vpop.trf.xlu0
  %v2373 = vpop.trf.xlu0
  %v2374 = vpop.trf.xlu0
  %v2375 = vpop.trf.xlu0
  %v2376 = vpop.trf.xlu0
  %v2377 = vpop.trf.xlu0
  %v2378 = vpop.trf.xlu0
  %2379 = vxpose.xlu0.b32.start [1/16] %v1604, 128
  %2380 = vxpose.xlu0.b32.cont [2/16] 0.0, 128
  %2381 = vxpose.xlu0.b32.cont [3/16] 0.0, 128
  %2382 = vxpose.xlu0.b32.cont [4/16] 0.0, 128
  %2383 = vxpose.xlu0.b32.cont [5/16] 0.0, 128
  %2384 = vxpose.xlu0.b32.cont [6/16] 0.0, 128
  %2385 = vxpose.xlu0.b32.cont [7/16] 0.0, 128
  %2386 = vxpose.xlu0.b32.cont [8/16] 0.0, 128
  %2387 = vxpose.xlu0.b32.cont [9/16] 0.0, 128
  %2388 = vxpose.xlu0.b32.cont [10/16] 0.0, 128
  %2389 = vxpose.xlu0.b32.cont [11/16] 0.0, 128
  %2390 = vxpose.xlu0.b32.cont [12/16] 0.0, 128
  %2391 = vxpose.xlu0.b32.cont [13/16] 0.0, 128
  %2392 = vxpose.xlu0.b32.cont [14/16] 0.0, 128
  %2393 = vxpose.xlu0.b32.cont [15/16] 0.0, 128
  %2394 = vxpose.xlu0.b32.end [16/16] 0.0, 128
  %v2395 = vpop.trf.xlu0
  %v2396 = vpop.trf.xlu0
  %v2397 = vpop.trf.xlu0
  %v2398 = vpop.trf.xlu0
  %v2399 = vpop.trf.xlu0
  %v2400 = vpop.trf.xlu0
  %v2401 = vpop.trf.xlu0
  %v2402 = vpop.trf.xlu0
  %v2403 = vpop.trf.xlu0
  %v2404 = vpop.trf.xlu0
  %v2405 = vpop.trf.xlu0
  %v2406 = vpop.trf.xlu0
  %v2407 = vpop.trf.xlu0
  %v2408 = vpop.trf.xlu0
  %v2409 = vpop.trf.xlu0
  %v2410 = vpop.trf.xlu0
  %2411 = vxpose.xlu0.b32.start [1/16] %v1654, 128
  %2412 = vxpose.xlu0.b32.cont [2/16] 0.0, 128
  %2413 = vxpose.xlu0.b32.cont [3/16] 0.0, 128
  %2414 = vxpose.xlu0.b32.cont [4/16] 0.0, 128
  %2415 = vxpose.xlu0.b32.cont [5/16] 0.0, 128
  %2416 = vxpose.xlu0.b32.cont [6/16] 0.0, 128
  %2417 = vxpose.xlu0.b32.cont [7/16] 0.0, 128
  %2418 = vxpose.xlu0.b32.cont [8/16] 0.0, 128
  %2419 = vxpose.xlu0.b32.cont [9/16] 0.0, 128
  %2420 = vxpose.xlu0.b32.cont [10/16] 0.0, 128
  %2421 = vxpose.xlu0.b32.cont [11/16] 0.0, 128
  %2422 = vxpose.xlu0.b32.cont [12/16] 0.0, 128
  %2423 = vxpose.xlu0.b32.cont [13/16] 0.0, 128
  %2424 = vxpose.xlu0.b32.cont [14/16] 0.0, 128
  %2425 = vxpose.xlu0.b32.cont [15/16] 0.0, 128
  %2426 = vxpose.xlu0.b32.end [16/16] 0.0, 128
  %v2427 = vpop.trf.xlu0
  %v2428 = vpop.trf.xlu0
  %v2429 = vpop.trf.xlu0
  %v2430 = vpop.trf.xlu0
  %v2431 = vpop.trf.xlu0
  %v2432 = vpop.trf.xlu0
  %v2433 = vpop.trf.xlu0
  %v2434 = vpop.trf.xlu0
  %v2435 = vpop.trf.xlu0
  %v2436 = vpop.trf.xlu0
  %v2437 = vpop.trf.xlu0
  %v2438 = vpop.trf.xlu0
  %v2439 = vpop.trf.xlu0
  %v2440 = vpop.trf.xlu0
  %v2441 = vpop.trf.xlu0
  %v2442 = vpop.trf.xlu0
  %2443 = vxpose.xlu0.b32.start [1/16] %v1609, 128
  %2444 = vxpose.xlu0.b32.cont [2/16] 0.0, 128
  %2445 = vxpose.xlu0.b32.cont [3/16] 0.0, 128
  %2446 = vxpose.xlu0.b32.cont [4/16] 0.0, 128
  %2447 = vxpose.xlu0.b32.cont [5/16] 0.0, 128
  %2448 = vxpose.xlu0.b32.cont [6/16] 0.0, 128
  %2449 = vxpose.xlu0.b32.cont [7/16] 0.0, 128
  %2450 = vxpose.xlu0.b32.cont [8/16] 0.0, 128
  %2451 = vxpose.xlu0.b32.cont [9/16] 0.0, 128
  %2452 = vxpose.xlu0.b32.cont [10/16] 0.0, 128
  %2453 = vxpose.xlu0.b32.cont [11/16] 0.0, 128
  %2454 = vxpose.xlu0.b32.cont [12/16] 0.0, 128
  %2455 = vxpose.xlu0.b32.cont [13/16] 0.0, 128
  %2456 = vxpose.xlu0.b32.cont [14/16] 0.0, 128
  %2457 = vxpose.xlu0.b32.cont [15/16] 0.0, 128
  %2458 = vxpose.xlu0.b32.end [16/16] 0.0, 128
  %v2459 = vpop.trf.xlu0
  %v2460 = vpop.trf.xlu0
  %v2461 = vpop.trf.xlu0
  %v2462 = vpop.trf.xlu0
  %v2463 = vpop.trf.xlu0
  %v2464 = vpop.trf.xlu0
  %v2465 = vpop.trf.xlu0
  %v2466 = vpop.trf.xlu0
  %v2467 = vpop.trf.xlu0
  %v2468 = vpop.trf.xlu0
  %v2469 = vpop.trf.xlu0
  %v2470 = vpop.trf.xlu0
  %v2471 = vpop.trf.xlu0
  %v2472 = vpop.trf.xlu0
  %v2473 = vpop.trf.xlu0
  %v2474 = vpop.trf.xlu0
  %2475 = vxpose.xlu0.b32.start [1/16] %v1655, 128
  %2476 = vxpose.xlu0.b32.cont [2/16] 0.0, 128
  %2477 = vxpose.xlu0.b32.cont [3/16] 0.0, 128
  %2478 = vxpose.xlu0.b32.cont [4/16] 0.0, 128
  %2479 = vxpose.xlu0.b32.cont [5/16] 0.0, 128
  %2480 = vxpose.xlu0.b32.cont [6/16] 0.0, 128
  %2481 = vxpose.xlu0.b32.cont [7/16] 0.0, 128
  %2482 = vxpose.xlu0.b32.cont [8/16] 0.0, 128
  %2483 = vxpose.xlu0.b32.cont [9/16] 0.0, 128
  %2484 = vxpose.xlu0.b32.cont [10/16] 0.0, 128
  %2485 = vxpose.xlu0.b32.cont [11/16] 0.0, 128
  %2486 = vxpose.xlu0.b32.cont [12/16] 0.0, 128
  %2487 = vxpose.xlu0.b32.cont [13/16] 0.0, 128
  %2488 = vxpose.xlu0.b32.cont [14/16] 0.0, 128
  %2489 = vxpose.xlu0.b32.cont [15/16] 0.0, 128
  %2490 = vxpose.xlu0.b32.end [16/16] 0.0, 128
  %v2491 = vpop.trf.xlu0
  %v2492 = vpop.trf.xlu0
  %v2493 = vpop.trf.xlu0
  %v2494 = vpop.trf.xlu0
  %v2495 = vpop.trf.xlu0
  %v2496 = vpop.trf.xlu0
  %v2497 = vpop.trf.xlu0
  %v2498 = vpop.trf.xlu0
  %v2499 = vpop.trf.xlu0
  %v2500 = vpop.trf.xlu0
  %v2501 = vpop.trf.xlu0
  %v2502 = vpop.trf.xlu0
  %v2503 = vpop.trf.xlu0
  %v2504 = vpop.trf.xlu0
  %v2505 = vpop.trf.xlu0
  %v2506 = vpop.trf.xlu0
  %2507 = vxpose.xlu0.b32.start [1/16] %v1614, 128
  %2508 = vxpose.xlu0.b32.cont [2/16] 0.0, 128
  %2509 = vxpose.xlu0.b32.cont [3/16] 0.0, 128
  %2510 = vxpose.xlu0.b32.cont [4/16] 0.0, 128
  %2511 = vxpose.xlu0.b32.cont [5/16] 0.0, 128
  %2512 = vxpose.xlu0.b32.cont [6/16] 0.0, 128
  %2513 = vxpose.xlu0.b32.cont [7/16] 0.0, 128
  %2514 = vxpose.xlu0.b32.cont [8/16] 0.0, 128
  %2515 = vxpose.xlu0.b32.cont [9/16] 0.0, 128
  %2516 = vxpose.xlu0.b32.cont [10/16] 0.0, 128
  %2517 = vxpose.xlu0.b32.cont [11/16] 0.0, 128
  %2518 = vxpose.xlu0.b32.cont [12/16] 0.0, 128
  %2519 = vxpose.xlu0.b32.cont [13/16] 0.0, 128
  %2520 = vxpose.xlu0.b32.cont [14/16] 0.0, 128
  %2521 = vxpose.xlu0.b32.cont [15/16] 0.0, 128
  %2522 = vxpose.xlu0.b32.end [16/16] 0.0, 128
  %v2523 = vpop.trf.xlu0
  %v2524 = vpop.trf.xlu0
  %v2525 = vpop.trf.xlu0
  %v2526 = vpop.trf.xlu0
  %v2527 = vpop.trf.xlu0
  %v2528 = vpop.trf.xlu0
  %v2529 = vpop.trf.xlu0
  %v2530 = vpop.trf.xlu0
  %v2531 = vpop.trf.xlu0
  %v2532 = vpop.trf.xlu0
  %v2533 = vpop.trf.xlu0
  %v2534 = vpop.trf.xlu0
  %v2535 = vpop.trf.xlu0
  %v2536 = vpop.trf.xlu0
  %v2537 = vpop.trf.xlu0
  %v2538 = vpop.trf.xlu0
  %2539 = vxpose.xlu0.b32.start [1/16] %v1656, 128
  %2540 = vxpose.xlu0.b32.cont [2/16] 0.0, 128
  %2541 = vxpose.xlu0.b32.cont [3/16] 0.0, 128
  %2542 = vxpose.xlu0.b32.cont [4/16] 0.0, 128
  %2543 = vxpose.xlu0.b32.cont [5/16] 0.0, 128
  %2544 = vxpose.xlu0.b32.cont [6/16] 0.0, 128
  %2545 = vxpose.xlu0.b32.cont [7/16] 0.0, 128
  %2546 = vxpose.xlu0.b32.cont [8/16] 0.0, 128
  %2547 = vxpose.xlu0.b32.cont [9/16] 0.0, 128
  %2548 = vxpose.xlu0.b32.cont [10/16] 0.0, 128
  %2549 = vxpose.xlu0.b32.cont [11/16] 0.0, 128
  %2550 = vxpose.xlu0.b32.cont [12/16] 0.0, 128
  %2551 = vxpose.xlu0.b32.cont [13/16] 0.0, 128
  %2552 = vxpose.xlu0.b32.cont [14/16] 0.0, 128
  %2553 = vxpose.xlu0.b32.cont [15/16] 0.0, 128
  %2554 = vxpose.xlu0.b32.end [16/16] 0.0, 128
  %v2555 = vpop.trf.xlu0
  %v2556 = vpop.trf.xlu0
  %v2557 = vpop.trf.xlu0
  %v2558 = vpop.trf.xlu0
  %v2559 = vpop.trf.xlu0
  %v2560 = vpop.trf.xlu0
  %v2561 = vpop.trf.xlu0
  %v2562 = vpop.trf.xlu0
  %v2563 = vpop.trf.xlu0
  %v2564 = vpop.trf.xlu0
  %v2565 = vpop.trf.xlu0
  %v2566 = vpop.trf.xlu0
  %v2567 = vpop.trf.xlu0
  %v2568 = vpop.trf.xlu0
  %v2569 = vpop.trf.xlu0
  %v2570 = vpop.trf.xlu0
  %2571 = vxpose.xlu0.b32.start [1/16] %v1619, 128
  %2572 = vxpose.xlu0.b32.cont [2/16] 0.0, 128
  %2573 = vxpose.xlu0.b32.cont [3/16] 0.0, 128
  %2574 = vxpose.xlu0.b32.cont [4/16] 0.0, 128
  %2575 = vxpose.xlu0.b32.cont [5/16] 0.0, 128
  %2576 = vxpose.xlu0.b32.cont [6/16] 0.0, 128
  %2577 = vxpose.xlu0.b32.cont [7/16] 0.0, 128
  %2578 = vxpose.xlu0.b32.cont [8/16] 0.0, 128
  %2579 = vxpose.xlu0.b32.cont [9/16] 0.0, 128
  %2580 = vxpose.xlu0.b32.cont [10/16] 0.0, 128
  %2581 = vxpose.xlu0.b32.cont [11/16] 0.0, 128
  %2582 = vxpose.xlu0.b32.cont [12/16] 0.0, 128
  %2583 = vxpose.xlu0.b32.cont [13/16] 0.0, 128
  %2584 = vxpose.xlu0.b32.cont [14/16] 0.0, 128
  %2585 = vxpose.xlu0.b32.cont [15/16] 0.0, 128
  %2586 = vxpose.xlu0.b32.end [16/16] 0.0, 128
  %v2587 = vpop.trf.xlu0
  %v2588 = vpop.trf.xlu0
  %v2589 = vpop.trf.xlu0
  %v2590 = vpop.trf.xlu0
  %v2591 = vpop.trf.xlu0
  %v2592 = vpop.trf.xlu0
  %v2593 = vpop.trf.xlu0
  %v2594 = vpop.trf.xlu0
  %v2595 = vpop.trf.xlu0
  %v2596 = vpop.trf.xlu0
  %v2597 = vpop.trf.xlu0
  %v2598 = vpop.trf.xlu0
  %v2599 = vpop.trf.xlu0
  %v2600 = vpop.trf.xlu0
  %v2601 = vpop.trf.xlu0
  %v2602 = vpop.trf.xlu0
  %2603 = vxpose.xlu0.b32.start [1/16] %v1657, 128
  %2604 = vxpose.xlu0.b32.cont [2/16] 0.0, 128
  %2605 = vxpose.xlu0.b32.cont [3/16] 0.0, 128
  %2606 = vxpose.xlu0.b32.cont [4/16] 0.0, 128
  %2607 = vxpose.xlu0.b32.cont [5/16] 0.0, 128
  %2608 = vxpose.xlu0.b32.cont [6/16] 0.0, 128
  %2609 = vxpose.xlu0.b32.cont [7/16] 0.0, 128
  %2610 = vxpose.xlu0.b32.cont [8/16] 0.0, 128
  %2611 = vxpose.xlu0.b32.cont [9/16] 0.0, 128
  %2612 = vxpose.xlu0.b32.cont [10/16] 0.0, 128
  %2613 = vxpose.xlu0.b32.cont [11/16] 0.0, 128
  %2614 = vxpose.xlu0.b32.cont [12/16] 0.0, 128
  %2615 = vxpose.xlu0.b32.cont [13/16] 0.0, 128
  %2616 = vxpose.xlu0.b32.cont [14/16] 0.0, 128
  %2617 = vxpose.xlu0.b32.cont [15/16] 0.0, 128
  %2618 = vxpose.xlu0.b32.end [16/16] 0.0, 128
  %v2619 = vpop.trf.xlu0
  %v2620 = vpop.trf.xlu0
  %v2621 = vpop.trf.xlu0
  %v2622 = vpop.trf.xlu0
  %v2623 = vpop.trf.xlu0
  %v2624 = vpop.trf.xlu0
  %v2625 = vpop.trf.xlu0
  %v2626 = vpop.trf.xlu0
  %v2627 = vpop.trf.xlu0
  %v2628 = vpop.trf.xlu0
  %v2629 = vpop.trf.xlu0
  %v2630 = vpop.trf.xlu0
  %v2631 = vpop.trf.xlu0
  %v2632 = vpop.trf.xlu0
  %v2633 = vpop.trf.xlu0
  %v2634 = vpop.trf.xlu0
  %2635 = vxpose.xlu0.b32.start [1/16] %v1624, 128
  %2636 = vxpose.xlu0.b32.cont [2/16] 0.0, 128
  %2637 = vxpose.xlu0.b32.cont [3/16] 0.0, 128
  %2638 = vxpose.xlu0.b32.cont [4/16] 0.0, 128
  %2639 = vxpose.xlu0.b32.cont [5/16] 0.0, 128
  %2640 = vxpose.xlu0.b32.cont [6/16] 0.0, 128
  %2641 = vxpose.xlu0.b32.cont [7/16] 0.0, 128
  %2642 = vxpose.xlu0.b32.cont [8/16] 0.0, 128
  %2643 = vxpose.xlu0.b32.cont [9/16] 0.0, 128
  %2644 = vxpose.xlu0.b32.cont [10/16] 0.0, 128
  %2645 = vxpose.xlu0.b32.cont [11/16] 0.0, 128
  %2646 = vxpose.xlu0.b32.cont [12/16] 0.0, 128
  %2647 = vxpose.xlu0.b32.cont [13/16] 0.0, 128
  %2648 = vxpose.xlu0.b32.cont [14/16] 0.0, 128
  %2649 = vxpose.xlu0.b32.cont [15/16] 0.0, 128
  %2650 = vxpose.xlu0.b32.end [16/16] 0.0, 128
  %v2651 = vpop.trf.xlu0
  %v2652 = vpop.trf.xlu0
  %v2653 = vpop.trf.xlu0
  %v2654 = vpop.trf.xlu0
  %v2655 = vpop.trf.xlu0
  %v2656 = vpop.trf.xlu0
  %v2657 = vpop.trf.xlu0
  %v2658 = vpop.trf.xlu0
  %v2659 = vpop.trf.xlu0
  %v2660 = vpop.trf.xlu0
  %v2661 = vpop.trf.xlu0
  %v2662 = vpop.trf.xlu0
  %v2663 = vpop.trf.xlu0
  %v2664 = vpop.trf.xlu0
  %v2665 = vpop.trf.xlu0
  %v2666 = vpop.trf.xlu0
  %2667 = vxpose.xlu0.b32.start [1/16] %v1658, 128
  %2668 = vxpose.xlu0.b32.cont [2/16] 0.0, 128
  %2669 = vxpose.xlu0.b32.cont [3/16] 0.0, 128
  %2670 = vxpose.xlu0.b32.cont [4/16] 0.0, 128
  %2671 = vxpose.xlu0.b32.cont [5/16] 0.0, 128
  %2672 = vxpose.xlu0.b32.cont [6/16] 0.0, 128
  %2673 = vxpose.xlu0.b32.cont [7/16] 0.0, 128
  %2674 = vxpose.xlu0.b32.cont [8/16] 0.0, 128
  %2675 = vxpose.xlu0.b32.cont [9/16] 0.0, 128
  %2676 = vxpose.xlu0.b32.cont [10/16] 0.0, 128
  %2677 = vxpose.xlu0.b32.cont [11/16] 0.0, 128
  %2678 = vxpose.xlu0.b32.cont [12/16] 0.0, 128
  %2679 = vxpose.xlu0.b32.cont [13/16] 0.0, 128
  %2680 = vxpose.xlu0.b32.cont [14/16] 0.0, 128
  %2681 = vxpose.xlu0.b32.cont [15/16] 0.0, 128
  %2682 = vxpose.xlu0.b32.end [16/16] 0.0, 128
  %v2683 = vpop.trf.xlu0
  %v2684 = vpop.trf.xlu0
  %v2685 = vpop.trf.xlu0
  %v2686 = vpop.trf.xlu0
  %v2687 = vpop.trf.xlu0
  %v2688 = vpop.trf.xlu0
  %v2689 = vpop.trf.xlu0
  %v2690 = vpop.trf.xlu0
  %v2691 = vpop.trf.xlu0
  %v2692 = vpop.trf.xlu0
  %v2693 = vpop.trf.xlu0
  %v2694 = vpop.trf.xlu0
  %v2695 = vpop.trf.xlu0
  %v2696 = vpop.trf.xlu0
  %v2697 = vpop.trf.xlu0
  %v2698 = vpop.trf.xlu0
  %v2699 = vld [vmem:[%s3] sm:$0xff]
  %v2700 = vadd.f32 %v1691, %v2699
  %v2701 = vadd.f32 %v1723, %v2699
  %v2702 = vadd.f32 %v1755, %v2699
  %v2703 = vadd.f32 %v1787, %v2699
  %v2704 = vadd.f32 %v1819, %v2699
  %v2705 = vadd.f32 %v1851, %v2699
  %v2706 = vadd.f32 %v1883, %v2699
  %v2707 = vadd.f32 %v1915, %v2699
  %v2708 = vadd.f32 %v1947, %v2699
  %v2709 = vadd.f32 %v1979, %v2699
  %v2710 = vadd.f32 %v2011, %v2699
  %v2711 = vadd.f32 %v2043, %v2699
  %v2712 = vadd.f32 %v2075, %v2699
  %v2713 = vadd.f32 %v2107, %v2699
  %v2714 = vadd.f32 %v2139, %v2699
  %v2715 = vadd.f32 %v2171, %v2699
  %v2716 = vadd.f32 %v2203, %v2699
  %v2717 = vadd.f32 %v2235, %v2699
  %v2718 = vadd.f32 %v2267, %v2699
  %v2719 = vadd.f32 %v2299, %v2699
  %v2720 = vadd.f32 %v2331, %v2699
  %v2721 = vadd.f32 %v2363, %v2699
  %v2722 = vadd.f32 %v2395, %v2699
  %v2723 = vadd.f32 %v2427, %v2699
  %v2724 = vadd.f32 %v2459, %v2699
  %v2725 = vadd.f32 %v2491, %v2699
  %v2726 = vadd.f32 %v2523, %v2699
  %v2727 = vadd.f32 %v2555, %v2699
  %v2728 = vadd.f32 %v2587, %v2699
  %v2729 = vadd.f32 %v2619, %v2699
  %v2730 = vadd.f32 %v2651, %v2699
  %v2731 = vadd.f32 %v2683, %v2699
  %2732 = vst.msk [vmem:[%s4] sm:$0xff] %vm50, %v2700
  %2733 = vst.msk [vmem:[%s4 + $0x8] sm:$0xff] %vm50, %v2701
  %2734 = vst.msk [vmem:[%s4 + $0x10] sm:$0xff] %vm50, %v2702
  %2735 = vst.msk [vmem:[%s4 + $0x18] sm:$0xff] %vm50, %v2703
  %2736 = vst.msk [vmem:[%s4 + $0x20] sm:$0xff] %vm50, %v2704
  %2737 = vst.msk [vmem:[%s4 + $0x28] sm:$0xff] %vm50, %v2705
  %2738 = vst.msk [vmem:[%s4 + $0x30] sm:$0xff] %vm50, %v2706
  %2739 = vst.msk [vmem:[%s4 + $0x38] sm:$0xff] %vm50, %v2707
  %2740 = vst.msk [vmem:[%s4 + $0x40] sm:$0xff] %vm50, %v2708
  %2741 = vst.msk [vmem:[%s4 + $0x48] sm:$0xff] %vm50, %v2709
  %2742 = vst.msk [vmem:[%s4 + $0x50] sm:$0xff] %vm50, %v2710
  %2743 = vst.msk [vmem:[%s4 + $0x58] sm:$0xff] %vm50, %v2711
  %2744 = vst.msk [vmem:[%s4 + $0x60] sm:$0xff] %vm50, %v2712
  %2745 = vst.msk [vmem:[%s4 + $0x68] sm:$0xff] %vm50, %v2713
  %2746 = vst.msk [vmem:[%s4 + $0x70] sm:$0xff] %vm50, %v2714
  %2747 = vst.msk [vmem:[%s4 + $0x78] sm:$0xff] %vm50, %v2715
  %2748 = vst.msk [vmem:[%s4 + $0x80] sm:$0xff] %vm50, %v2716
  %2749 = vst.msk [vmem:[%s4 + $0x88] sm:$0xff] %vm50, %v2717
  %2750 = vst.msk [vmem:[%s4 + $0x90] sm:$0xff] %vm50, %v2718
  %2751 = vst.msk [vmem:[%s4 + $0x98] sm:$0xff] %vm50, %v2719
  %2752 = vst.msk [vmem:[%s4 + $0xa0] sm:$0xff] %vm50, %v2720
  %2753 = vst.msk [vmem:[%s4 + $0xa8] sm:$0xff] %vm50, %v2721
  %2754 = vst.msk [vmem:[%s4 + $0xb0] sm:$0xff] %vm50, %v2722
  %2755 = vst.msk [vmem:[%s4 + $0xb8] sm:$0xff] %vm50, %v2723
  %2756 = vst.msk [vmem:[%s4 + $0xc0] sm:$0xff] %vm50, %v2724
  %2757 = vst.msk [vmem:[%s4 + $0xc8] sm:$0xff] %vm50, %v2725
  %2758 = vst.msk [vmem:[%s4 + $0xd0] sm:$0xff] %vm50, %v2726
  %2759 = vst.msk [vmem:[%s4 + $0xd8] sm:$0xff] %vm50, %v2727
  %2760 = vst.msk [vmem:[%s4 + $0xe0] sm:$0xff] %vm50, %v2728
  %2761 = vst.msk [vmem:[%s4 + $0xe8] sm:$0xff] %vm50, %v2729
  %2762 = vst.msk [vmem:[%s4 + $0xf0] sm:$0xff] %vm50, %v2730
  %2763 = vst.msk [vmem:[%s4 + $0xf8] sm:$0xff] %vm50, %v2731
  // Predicated region
  $region18: #{tpu_custom_call.1} parent=0 // pred_check
    _
  $region19: #{tpu_custom_call.1} parent=0 // pred_check_branch
    %2765 = sbr.rel (0) target = $region21
  $region20: #{tpu_custom_call.1} parent=0 // pred_region
    _
  $region21: #{tpu_custom_call.1} parent=0 // pred_fallthru
    _
  // Predicated region
  $region22: #{tpu_custom_call.1} parent=0 // pred_check
    _
  $region23: #{tpu_custom_call.1} parent=0 // pred_check_branch
    %2767 = sbr.rel (0) target = $region25
  $region24: #{tpu_custom_call.1} parent=0 // pred_region
    _
  $region25: #{tpu_custom_call.1} parent=0 // pred_fallthru
    _

</llo_original>
